<compile_context>
chip_gen: v6e
topology: v6e:2x2x1
jax: 0.10.0
libtpu: 0.0.40
codegen_flags: <defaults>
</compile_context>

<pallas_src>
import functools

import jax
import jax.numpy as jnp
from jax.experimental import pallas as pl
from jax.experimental.pallas import tpu as pltpu

EPS = 1e-5


def basic_block_kernel(x_ref, r1_ref, g1_ref, b1_ref, r2_ref, g2_ref, b2_ref,
                       pb_ref, smat_ref, out_ref, *, inv_cnt):
    """All refs are lane-dense; everything heavy runs on the MXU.

    x_ref    : (N*H, W*C)        activations, lane-dense
    r*_ref   : (3, W*C, W*C)     per-kh lane-mixing (kw taps + channel mix)
    g*/b*_ref: (1, W*C)          BN affine params broadcast along the lane axis
    pb_ref   : (W*C, W*C)        pool-broadcast matrix (per-channel mean pooling)
    smat_ref : (2, N*H, N*H)     row-shift matrices for dh = -1, +1
    """
    x = x_ref[...]                                           # (NH, WC) f32

    def conv3x3(v, r_ref):
        # kw taps + channel mixing: one (NH,WC)@(WC,WC) matmul per kh tap.
        t_m = jnp.dot(v, r_ref[0], preferred_element_type=jnp.float32)  # dh=-1
        t_0 = jnp.dot(v, r_ref[1], preferred_element_type=jnp.float32)  # dh= 0
        t_p = jnp.dot(v, r_ref[2], preferred_element_type=jnp.float32)  # dh=+1
        # kh taps: row shifts via tiny (NH,NH) matmuls; zero rows implement the
        # conv zero padding and keep batch samples separated.
        acc = t_0
        acc = acc + jnp.dot(smat_ref[0], t_m, preferred_element_type=jnp.float32)
        acc = acc + jnp.dot(smat_ref[1], t_p, preferred_element_type=jnp.float32)
        return acc

    def batchnorm(y, g_ref, b_ref):
        # One-pass training-mode BN (biased variance), folded to scale/shift.
        s1 = jnp.sum(y, axis=0, keepdims=True)               # (1, WC)
        s2 = jnp.sum(y * y, axis=0, keepdims=True)           # (1, WC)
        mean = jnp.dot(s1, pb_ref[...],
                       preferred_element_type=jnp.float32) * inv_cnt
        ex2 = jnp.dot(s2, pb_ref[...],
                      preferred_element_type=jnp.float32) * inv_cnt
        var = ex2 - mean * mean
        scale = g_ref[...] * jax.lax.rsqrt(var + EPS)         # (1, WC)
        shift = b_ref[...] - mean * scale                     # (1, WC)
        return y * scale + shift

    out1 = jnp.maximum(batchnorm(conv3x3(x, r1_ref), g1_ref, b1_ref), 0.0)
    out2 = batchnorm(conv3x3(out1, r2_ref), g2_ref, b2_ref)
    out_ref[...] = jnp.maximum(out2 + x, 0.0).astype(out_ref.dtype)


# ----------------------------------------------------------------------------
# Wrapper-side (XLA) preprocessing: fold the 3x3 conv weights and BN params
# into lane-dense matrices once, outside the kernel.
# ----------------------------------------------------------------------------
def _conv_lane_matrices(w_hwio, w_spatial):
    """(3,3,Ci,Co) HWIO weights -> (3, W*Ci, W*Co) block-tridiagonal matrices."""
    kh, kw, ci, co = w_hwio.shape
    j_in = jnp.arange(w_spatial)[:, None]
    j_out = jnp.arange(w_spatial)[None, :]
    dw = j_in - j_out                                   # tap index kw = dw + 1
    valid = (jnp.abs(dw) <= 1)
    kw_idx = jnp.clip(dw + 1, 0, kw - 1)                # (W, W)
    blk = w_hwio[:, kw_idx] * valid[None, :, :, None, None]   # (3, W, W, Ci, Co)
    blk = jnp.transpose(blk, (0, 1, 3, 2, 4))                  # (3, W, Ci, W, Co)
    return blk.reshape(kh, w_spatial * ci, w_spatial * co)


def _row_shift_matrix(n, h, dh):
    """(N*H, N*H) matrix: S @ v picks row r+dh within the same image, else 0."""
    r = jnp.arange(n * h)
    i = r % h
    hit = (r[None, :] - r[:, None]) == dh
    valid = ((i + dh >= 0) & (i + dh < h))[:, None]
    return (hit & valid).astype(jnp.float32)


def basic_block(x_nchw, params):
    """x_nchw: (N, C, H, W) float32.  Returns (N, C, H, W)."""
    w1, g1, b1, w2, g2, b2 = params
    n, c, h, w = x_nchw.shape
    nh, wc = n * h, w * c

    # NCHW -> lane-dense (N*H, W*C): lane = j*C + c (channel fastest).
    x_dense = jnp.transpose(x_nchw, (0, 2, 3, 1)).reshape(nh, wc)

    r1 = _conv_lane_matrices(w1, w)                     # (3, WC, WC)
    r2 = _conv_lane_matrices(w2, w)
    g1d = jnp.tile(g1.reshape(1, c), (1, w)).astype(jnp.float32)
    b1d = jnp.tile(b1.reshape(1, c), (1, w)).astype(jnp.float32)
    g2d = jnp.tile(g2.reshape(1, c), (1, w)).astype(jnp.float32)
    b2d = jnp.tile(b2.reshape(1, c), (1, w)).astype(jnp.float32)

    lane = jnp.arange(wc)
    pool_bcast = (lane[:, None] % c == lane[None, :] % c).astype(jnp.float32)

    smat = jnp.stack([_row_shift_matrix(n, h, -1),      # dh = -1
                      _row_shift_matrix(n, h, +1)])     # dh = +1

    kernel = functools.partial(basic_block_kernel, inv_cnt=1.0 / float(n * h * w))

    out_dense = pl.pallas_call(
        kernel,
        out_shape=jax.ShapeDtypeStruct((nh, wc), jnp.float32),
        in_specs=[pl.BlockSpec(memory_space=pltpu.MemorySpace.VMEM)] * 9,
        out_specs=pl.BlockSpec(memory_space=pltpu.MemorySpace.VMEM),
    )(x_dense, r1, g1d, b1d, r2, g2d, b2d, pool_bcast, smat)

    out = out_dense.reshape(n, h, w, c)
    return jnp.transpose(out, (0, 3, 1, 2))             # NHWC -> NCHW


# ----------------------------------------------------------------------------
# Pure-JAX reference of the same forward (for correctness check).
# ----------------------------------------------------------------------------
def reference(x_nchw, params):
    w1, g1, b1, w2, g2, b2 = params
    x = jnp.transpose(x_nchw, (0, 2, 3, 1))

    def conv(y, wgt):
        return jax.lax.conv_general_dilated(
            y, wgt, window_strides=(1, 1), padding="SAME",
            dimension_numbers=("NHWC", "HWIO", "NHWC"))

    def bn(y, g, b):
        m = jnp.mean(y, axis=(0, 1, 2), keepdims=True)
        v = jnp.mean((y - m) ** 2, axis=(0, 1, 2), keepdims=True)
        return (y - m) * jax.lax.rsqrt(v + EPS) * g + b

    o = jax.nn.relu(bn(conv(x, w1), g1, b1))
    o = bn(conv(o, w2), g2, b2)
    o = jax.nn.relu(o + x)
    return jnp.transpose(o, (0, 3, 1, 2))


def init_params(key, in_planes, planes):
    k1, k2, k3, k4 = jax.random.split(key, 4)
    bound1 = 1.0 / (in_planes * 9) ** 0.5
    bound2 = 1.0 / (planes * 9) ** 0.5
    # HWIO conv weights (kernel_size=3, bias=False)
    w1 = jax.random.uniform(k1, (3, 3, in_planes, planes), jnp.float32,
                            -bound1, bound1)
    w2 = jax.random.uniform(k2, (3, 3, planes, planes), jnp.float32,
                            -bound2, bound2)
    # BN affine params (non-trivial, deterministic)
    g1 = 1.0 + 0.1 * jax.random.normal(k3, (planes,), jnp.float32)
    b1 = 0.1 * jax.random.normal(k4, (planes,), jnp.float32)
    g2 = 1.0 - 0.05 * jax.random.normal(k3, (planes,), jnp.float32)
    b2 = 0.05 * jax.random.normal(k4, (planes,), jnp.float32)
    return (w1, g1, b1, w2, g2, b2)


if __name__ == "__main__":
    # BasicBlock(in_planes=8, planes=8, stride=1): W*C = 128 -> fully lane-dense.
    N, C, H, W = 2, 8, 16, 16
    key = jax.random.PRNGKey(0)
    kx, kp = jax.random.split(key)
    x = jax.random.normal(kx, (N, C, H, W), jnp.float32)
    params = init_params(kp, C, C)

    out = jax.block_until_ready(basic_block(x, params))
    ref = jax.block_until_ready(reference(x, params))

    assert out.shape == (N, C, H, W)
    err = float(jnp.max(jnp.abs(out - ref)))
    assert jnp.allclose(out, ref, atol=1e-4, rtol=1e-4), f"max err {err}"
    print("KERNEL_OK")
</pallas_src>

<mosaic_0001>
module attributes {stable_mosaic.version = 11 : i64} {
  func.func @basic_block_kernel(%arg0: memref<32x128xf32, #tpu.memory_space<vmem>>, %arg1: memref<3x128x128xf32, #tpu.memory_space<vmem>>, %arg2: memref<1x128xf32, #tpu.memory_space<vmem>>, %arg3: memref<1x128xf32, #tpu.memory_space<vmem>>, %arg4: memref<3x128x128xf32, #tpu.memory_space<vmem>>, %arg5: memref<1x128xf32, #tpu.memory_space<vmem>>, %arg6: memref<1x128xf32, #tpu.memory_space<vmem>>, %arg7: memref<128x128xf32, #tpu.memory_space<vmem>>, %arg8: memref<2x32x32xf32, #tpu.memory_space<vmem>>, %arg9: memref<32x128xf32, #tpu.memory_space<vmem>>) attributes {dimension_semantics = [], scalar_prefetch = 0 : i64, scratch_operands = 0 : i64, tpu.core_type = #tpu.core_type<tc>} {
    %c0 = arith.constant 0 : index
    %c0_0 = arith.constant 0 : index
    %0 = vector.load %arg0[%c0, %c0_0] : memref<32x128xf32, #tpu.memory_space<vmem>>, vector<32x128xf32>
    %c0_1 = arith.constant 0 : index
    %c0_2 = arith.constant 0 : index
    %c0_3 = arith.constant 0 : index
    %1 = vector.load %arg1[%c0_1, %c0_2, %c0_3] : memref<3x128x128xf32, #tpu.memory_space<vmem>>, vector<1x128x128xf32>
    %2 = vector.shape_cast %1 : vector<1x128x128xf32> to vector<128x128xf32>
    %cst = arith.constant dense<0.000000e+00> : vector<32x128xf32>
    %3 = tpu.matmul %0, %2, %cst {dimension_numbers = #tpu.dot_dimension_numbers<[1], [0], [0], [1], [0, 0, 1, 1], [], []>} : vector<32x128xf32>, vector<128x128xf32>, vector<32x128xf32> -> vector<32x128xf32>
    %c1 = arith.constant 1 : index
    %c0_4 = arith.constant 0 : index
    %c0_5 = arith.constant 0 : index
    %4 = vector.load %arg1[%c1, %c0_4, %c0_5] : memref<3x128x128xf32, #tpu.memory_space<vmem>>, vector<1x128x128xf32>
    %5 = vector.shape_cast %4 : vector<1x128x128xf32> to vector<128x128xf32>
    %cst_6 = arith.constant dense<0.000000e+00> : vector<32x128xf32>
    %6 = tpu.matmul %0, %5, %cst_6 {dimension_numbers = #tpu.dot_dimension_numbers<[1], [0], [0], [1], [0, 0, 1, 1], [], []>} : vector<32x128xf32>, vector<128x128xf32>, vector<32x128xf32> -> vector<32x128xf32>
    %c2 = arith.constant 2 : index
    %c0_7 = arith.constant 0 : index
    %c0_8 = arith.constant 0 : index
    %7 = vector.load %arg1[%c2, %c0_7, %c0_8] : memref<3x128x128xf32, #tpu.memory_space<vmem>>, vector<1x128x128xf32>
    %8 = vector.shape_cast %7 : vector<1x128x128xf32> to vector<128x128xf32>
    %cst_9 = arith.constant dense<0.000000e+00> : vector<32x128xf32>
    %9 = tpu.matmul %0, %8, %cst_9 {dimension_numbers = #tpu.dot_dimension_numbers<[1], [0], [0], [1], [0, 0, 1, 1], [], []>} : vector<32x128xf32>, vector<128x128xf32>, vector<32x128xf32> -> vector<32x128xf32>
    %c0_10 = arith.constant 0 : index
    %c0_11 = arith.constant 0 : index
    %c0_12 = arith.constant 0 : index
    %10 = vector.load %arg8[%c0_10, %c0_11, %c0_12] : memref<2x32x32xf32, #tpu.memory_space<vmem>>, vector<1x32x32xf32>
    %11 = vector.shape_cast %10 : vector<1x32x32xf32> to vector<32x32xf32>
    %cst_13 = arith.constant dense<0.000000e+00> : vector<32x128xf32>
    %12 = tpu.matmul %11, %3, %cst_13 {dimension_numbers = #tpu.dot_dimension_numbers<[1], [0], [0], [1], [0, 0, 1, 1], [], []>} : vector<32x32xf32>, vector<32x128xf32>, vector<32x128xf32> -> vector<32x128xf32>
    %13 = arith.addf %6, %12 : vector<32x128xf32>
    %c1_14 = arith.constant 1 : index
    %c0_15 = arith.constant 0 : index
    %c0_16 = arith.constant 0 : index
    %14 = vector.load %arg8[%c1_14, %c0_15, %c0_16] : memref<2x32x32xf32, #tpu.memory_space<vmem>>, vector<1x32x32xf32>
    %15 = vector.shape_cast %14 : vector<1x32x32xf32> to vector<32x32xf32>
    %cst_17 = arith.constant dense<0.000000e+00> : vector<32x128xf32>
    %16 = tpu.matmul %15, %9, %cst_17 {dimension_numbers = #tpu.dot_dimension_numbers<[1], [0], [0], [1], [0, 0, 1, 1], [], []>} : vector<32x32xf32>, vector<32x128xf32>, vector<32x128xf32> -> vector<32x128xf32>
    %17 = arith.addf %13, %16 : vector<32x128xf32>
    %cst_18 = arith.constant dense<0.000000e+00> : vector<128xf32>
    %18 = vector.multi_reduction <add>, %17, %cst_18 [0] : vector<32x128xf32> to vector<128xf32>
    %19 = vector.shape_cast %18 : vector<128xf32> to vector<1x128xf32>
    %20 = arith.mulf %17, %17 : vector<32x128xf32>
    %cst_19 = arith.constant dense<0.000000e+00> : vector<128xf32>
    %21 = vector.multi_reduction <add>, %20, %cst_19 [0] : vector<32x128xf32> to vector<128xf32>
    %22 = vector.shape_cast %21 : vector<128xf32> to vector<1x128xf32>
    %c0_20 = arith.constant 0 : index
    %c0_21 = arith.constant 0 : index
    %23 = vector.load %arg7[%c0_20, %c0_21] : memref<128x128xf32, #tpu.memory_space<vmem>>, vector<128x128xf32>
    %cst_22 = arith.constant dense<0.000000e+00> : vector<1x128xf32>
    %24 = tpu.matmul %19, %23, %cst_22 {dimension_numbers = #tpu.dot_dimension_numbers<[1], [0], [0], [1], [0, 0, 1, 1], [], []>} : vector<1x128xf32>, vector<128x128xf32>, vector<1x128xf32> -> vector<1x128xf32>
    %cst_23 = arith.constant 0.001953125 : f32
    %25 = vector.broadcast %cst_23 : f32 to vector<1x128xf32>
    %26 = arith.mulf %24, %25 : vector<1x128xf32>
    %c0_24 = arith.constant 0 : index
    %c0_25 = arith.constant 0 : index
    %27 = vector.load %arg7[%c0_24, %c0_25] : memref<128x128xf32, #tpu.memory_space<vmem>>, vector<128x128xf32>
    %cst_26 = arith.constant dense<0.000000e+00> : vector<1x128xf32>
    %28 = tpu.matmul %22, %27, %cst_26 {dimension_numbers = #tpu.dot_dimension_numbers<[1], [0], [0], [1], [0, 0, 1, 1], [], []>} : vector<1x128xf32>, vector<128x128xf32>, vector<1x128xf32> -> vector<1x128xf32>
    %cst_27 = arith.constant 0.001953125 : f32
    %29 = vector.broadcast %cst_27 : f32 to vector<1x128xf32>
    %30 = arith.mulf %28, %29 : vector<1x128xf32>
    %31 = arith.mulf %26, %26 : vector<1x128xf32>
    %32 = arith.subf %30, %31 : vector<1x128xf32>
    %c0_28 = arith.constant 0 : index
    %c0_29 = arith.constant 0 : index
    %33 = vector.load %arg2[%c0_28, %c0_29] : memref<1x128xf32, #tpu.memory_space<vmem>>, vector<1x128xf32>
    %cst_30 = arith.constant 9.99999974E-6 : f32
    %34 = vector.broadcast %cst_30 : f32 to vector<1x128xf32>
    %35 = arith.addf %32, %34 : vector<1x128xf32>
    %36 = math.rsqrt %35 : vector<1x128xf32>
    %37 = arith.mulf %33, %36 : vector<1x128xf32>
    %c0_31 = arith.constant 0 : index
    %c0_32 = arith.constant 0 : index
    %38 = vector.load %arg3[%c0_31, %c0_32] : memref<1x128xf32, #tpu.memory_space<vmem>>, vector<1x128xf32>
    %39 = arith.mulf %26, %37 : vector<1x128xf32>
    %40 = arith.subf %38, %39 : vector<1x128xf32>
    %41 = vector.broadcast %37 : vector<1x128xf32> to vector<32x128xf32>
    %42 = arith.mulf %17, %41 : vector<32x128xf32>
    %43 = vector.broadcast %40 : vector<1x128xf32> to vector<32x128xf32>
    %44 = arith.addf %42, %43 : vector<32x128xf32>
    %cst_33 = arith.constant 0.000000e+00 : f32
    %45 = vector.broadcast %cst_33 : f32 to vector<32x128xf32>
    %46 = arith.maximumf %44, %45 : vector<32x128xf32>
    %c0_34 = arith.constant 0 : index
    %c0_35 = arith.constant 0 : index
    %c0_36 = arith.constant 0 : index
    %47 = vector.load %arg4[%c0_34, %c0_35, %c0_36] : memref<3x128x128xf32, #tpu.memory_space<vmem>>, vector<1x128x128xf32>
    %48 = vector.shape_cast %47 : vector<1x128x128xf32> to vector<128x128xf32>
    %cst_37 = arith.constant dense<0.000000e+00> : vector<32x128xf32>
    %49 = tpu.matmul %46, %48, %cst_37 {dimension_numbers = #tpu.dot_dimension_numbers<[1], [0], [0], [1], [0, 0, 1, 1], [], []>} : vector<32x128xf32>, vector<128x128xf32>, vector<32x128xf32> -> vector<32x128xf32>
    %c1_38 = arith.constant 1 : index
    %c0_39 = arith.constant 0 : index
    %c0_40 = arith.constant 0 : index
    %50 = vector.load %arg4[%c1_38, %c0_39, %c0_40] : memref<3x128x128xf32, #tpu.memory_space<vmem>>, vector<1x128x128xf32>
    %51 = vector.shape_cast %50 : vector<1x128x128xf32> to vector<128x128xf32>
    %cst_41 = arith.constant dense<0.000000e+00> : vector<32x128xf32>
    %52 = tpu.matmul %46, %51, %cst_41 {dimension_numbers = #tpu.dot_dimension_numbers<[1], [0], [0], [1], [0, 0, 1, 1], [], []>} : vector<32x128xf32>, vector<128x128xf32>, vector<32x128xf32> -> vector<32x128xf32>
    %c2_42 = arith.constant 2 : index
    %c0_43 = arith.constant 0 : index
    %c0_44 = arith.constant 0 : index
    %53 = vector.load %arg4[%c2_42, %c0_43, %c0_44] : memref<3x128x128xf32, #tpu.memory_space<vmem>>, vector<1x128x128xf32>
    %54 = vector.shape_cast %53 : vector<1x128x128xf32> to vector<128x128xf32>
    %cst_45 = arith.constant dense<0.000000e+00> : vector<32x128xf32>
    %55 = tpu.matmul %46, %54, %cst_45 {dimension_numbers = #tpu.dot_dimension_numbers<[1], [0], [0], [1], [0, 0, 1, 1], [], []>} : vector<32x128xf32>, vector<128x128xf32>, vector<32x128xf32> -> vector<32x128xf32>
    %c0_46 = arith.constant 0 : index
    %c0_47 = arith.constant 0 : index
    %c0_48 = arith.constant 0 : index
    %56 = vector.load %arg8[%c0_46, %c0_47, %c0_48] : memref<2x32x32xf32, #tpu.memory_space<vmem>>, vector<1x32x32xf32>
    %57 = vector.shape_cast %56 : vector<1x32x32xf32> to vector<32x32xf32>
    %cst_49 = arith.constant dense<0.000000e+00> : vector<32x128xf32>
    %58 = tpu.matmul %57, %49, %cst_49 {dimension_numbers = #tpu.dot_dimension_numbers<[1], [0], [0], [1], [0, 0, 1, 1], [], []>} : vector<32x32xf32>, vector<32x128xf32>, vector<32x128xf32> -> vector<32x128xf32>
    %59 = arith.addf %52, %58 : vector<32x128xf32>
    %c1_50 = arith.constant 1 : index
    %c0_51 = arith.constant 0 : index
    %c0_52 = arith.constant 0 : index
    %60 = vector.load %arg8[%c1_50, %c0_51, %c0_52] : memref<2x32x32xf32, #tpu.memory_space<vmem>>, vector<1x32x32xf32>
    %61 = vector.shape_cast %60 : vector<1x32x32xf32> to vector<32x32xf32>
    %cst_53 = arith.constant dense<0.000000e+00> : vector<32x128xf32>
    %62 = tpu.matmul %61, %55, %cst_53 {dimension_numbers = #tpu.dot_dimension_numbers<[1], [0], [0], [1], [0, 0, 1, 1], [], []>} : vector<32x32xf32>, vector<32x128xf32>, vector<32x128xf32> -> vector<32x128xf32>
    %63 = arith.addf %59, %62 : vector<32x128xf32>
    %cst_54 = arith.constant dense<0.000000e+00> : vector<128xf32>
    %64 = vector.multi_reduction <add>, %63, %cst_54 [0] : vector<32x128xf32> to vector<128xf32>
    %65 = vector.shape_cast %64 : vector<128xf32> to vector<1x128xf32>
    %66 = arith.mulf %63, %63 : vector<32x128xf32>
    %cst_55 = arith.constant dense<0.000000e+00> : vector<128xf32>
    %67 = vector.multi_reduction <add>, %66, %cst_55 [0] : vector<32x128xf32> to vector<128xf32>
    %68 = vector.shape_cast %67 : vector<128xf32> to vector<1x128xf32>
    %c0_56 = arith.constant 0 : index
    %c0_57 = arith.constant 0 : index
    %69 = vector.load %arg7[%c0_56, %c0_57] : memref<128x128xf32, #tpu.memory_space<vmem>>, vector<128x128xf32>
    %cst_58 = arith.constant dense<0.000000e+00> : vector<1x128xf32>
    %70 = tpu.matmul %65, %69, %cst_58 {dimension_numbers = #tpu.dot_dimension_numbers<[1], [0], [0], [1], [0, 0, 1, 1], [], []>} : vector<1x128xf32>, vector<128x128xf32>, vector<1x128xf32> -> vector<1x128xf32>
    %cst_59 = arith.constant 0.001953125 : f32
    %71 = vector.broadcast %cst_59 : f32 to vector<1x128xf32>
    %72 = arith.mulf %70, %71 : vector<1x128xf32>
    %c0_60 = arith.constant 0 : index
    %c0_61 = arith.constant 0 : index
    %73 = vector.load %arg7[%c0_60, %c0_61] : memref<128x128xf32, #tpu.memory_space<vmem>>, vector<128x128xf32>
    %cst_62 = arith.constant dense<0.000000e+00> : vector<1x128xf32>
    %74 = tpu.matmul %68, %73, %cst_62 {dimension_numbers = #tpu.dot_dimension_numbers<[1], [0], [0], [1], [0, 0, 1, 1], [], []>} : vector<1x128xf32>, vector<128x128xf32>, vector<1x128xf32> -> vector<1x128xf32>
    %cst_63 = arith.constant 0.001953125 : f32
    %75 = vector.broadcast %cst_63 : f32 to vector<1x128xf32>
    %76 = arith.mulf %74, %75 : vector<1x128xf32>
    %77 = arith.mulf %72, %72 : vector<1x128xf32>
    %78 = arith.subf %76, %77 : vector<1x128xf32>
    %c0_64 = arith.constant 0 : index
    %c0_65 = arith.constant 0 : index
    %79 = vector.load %arg5[%c0_64, %c0_65] : memref<1x128xf32, #tpu.memory_space<vmem>>, vector<1x128xf32>
    %cst_66 = arith.constant 9.99999974E-6 : f32
    %80 = vector.broadcast %cst_66 : f32 to vector<1x128xf32>
    %81 = arith.addf %78, %80 : vector<1x128xf32>
    %82 = math.rsqrt %81 : vector<1x128xf32>
    %83 = arith.mulf %79, %82 : vector<1x128xf32>
    %c0_67 = arith.constant 0 : index
    %c0_68 = arith.constant 0 : index
    %84 = vector.load %arg6[%c0_67, %c0_68] : memref<1x128xf32, #tpu.memory_space<vmem>>, vector<1x128xf32>
    %85 = arith.mulf %72, %83 : vector<1x128xf32>
    %86 = arith.subf %84, %85 : vector<1x128xf32>
    %87 = vector.broadcast %83 : vector<1x128xf32> to vector<32x128xf32>
    %88 = arith.mulf %63, %87 : vector<32x128xf32>
    %89 = vector.broadcast %86 : vector<1x128xf32> to vector<32x128xf32>
    %90 = arith.addf %88, %89 : vector<32x128xf32>
    %91 = arith.addf %90, %0 : vector<32x128xf32>
    %cst_69 = arith.constant 0.000000e+00 : f32
    %92 = vector.broadcast %cst_69 : f32 to vector<32x128xf32>
    %93 = arith.maximumf %91, %92 : vector<32x128xf32>
    %c0_70 = arith.constant 0 : index
    %c0_71 = arith.constant 0 : index
    %94 = vector.load %arg9[%c0_70, %c0_71] : memref<32x128xf32, #tpu.memory_space<vmem>>, vector<32x128xf32>
    tpu.vector_store %arg9[%c0_70, %c0_71], %93 {strides = array<i32>} : memref<32x128xf32, #tpu.memory_space<vmem>>, vector<32x128xf32>,
    return
  }
}

</mosaic_0001>

<llo_original>
// kernel: tpu_custom_call.1
$region0: #{tpu_custom_call.1}
  #allocation0 [shape = 'u32[]', space=smem, size = 0x4, offset = 0x4, fixed_abs, tag = 'smem constant byte address 0x4 - core index']
  #allocation1 [shape = 'u32[144,128]{1,0:T(1,128)}', space=vmem, size = 0x12000, scoped, tag = 'internal scratch']
  %s0 = inlined_call_operand.hbm [shape: f32[32,128], index: 0, kind: input, shape index: {}]
  %s1 = inlined_call_operand.hbm [shape: f32[3,128,128], index: 1, kind: input, shape index: {}]
  %s2 = inlined_call_operand.vmem [shape: f32[1,128], index: 2, kind: input, shape index: {}]
  %s3 = inlined_call_operand.vmem [shape: f32[1,128], index: 3, kind: input, shape index: {}]
  %s4 = inlined_call_operand.hbm [shape: f32[3,128,128], index: 4, kind: input, shape index: {}]
  %s5 = inlined_call_operand.vmem [shape: f32[1,128], index: 5, kind: input, shape index: {}]
  %s6 = inlined_call_operand.vmem [shape: f32[1,128], index: 6, kind: input, shape index: {}]
  %s7 = inlined_call_operand.hbm [shape: f32[128,128], index: 7, kind: input, shape index: {}]
  %s8 = inlined_call_operand.hbm [shape: f32[2,32,32], index: 8, kind: input, shape index: {}]
  %s9 = inlined_call_operand.hbm [shape: f32[32,128], index: 9, kind: output, shape index: {}]
  %s10 = sld [smem:[#allocation0]]
  $region66: #{tpu_custom_call.1} parent=0
    _
  %s12 = ssub.s32 1, %s10
  %s13 = scalar_select 0, %s12, %s10
  $region1: #{tpu_custom_call.1} parent=0
    #allocation2 [shape = 'u8[16384]{0}', space=vmem, size = 0x4000, scoped, tag = 'input window, operand 0, single buffered']
    #allocation3 [shape = 's32[1]{0}', space=sflag, size = 0x4, scoped, tag = 'scoped memory for tpu_custom_call.1']
    #allocation4 [shape = 's32[1]{0}', space=sflag, size = 0x4, scoped, tag = 'scoped memory for tpu_custom_call.1']
    #allocation5 [shape = 'u8[196608]{0}', space=vmem, size = 0x30000, scoped, tag = 'input window, operand 1, single buffered']
    #allocation6 [shape = 's32[1]{0}', space=sflag, size = 0x4, scoped, tag = 'scoped memory for tpu_custom_call.1']
    #allocation7 [shape = 'u8[196608]{0}', space=vmem, size = 0x30000, scoped, tag = 'input window, operand 4, single buffered']
    #allocation8 [shape = 'u8[65536]{0}', space=vmem, size = 0x10000, scoped, tag = 'input window, operand 7, single buffered']
    #allocation9 [shape = 's32[1]{0}', space=sflag, size = 0x4, scoped, tag = 'scoped memory for tpu_custom_call.1']
    #allocation10 [shape = 'u8[32768]{0}', space=vmem, size = 0x8000, scoped, tag = 'input window, operand 8, single buffered']
    #allocation11 [shape = 'u8[16384]{0}', space=vmem, size = 0x4000, scoped, tag = 'output window, operand 0, single buffered']
    %14 = vsyncpa [#allocation3], 0
    %15 = vsyncpa [#allocation6], 0
    %16 = vsyncpa [#allocation9], 0
    %17 = vsyncpa [#allocation4], 0
    // Predicated region
    $region2: #{tpu_custom_call.1} parent=1 // pred_check
      _
    $region3: #{tpu_custom_call.1} parent=1 // pred_check_branch
      %19 = sbr.rel (0) target = $region5
    $region4: #{tpu_custom_call.1} parent=1 // pred_region
      %s21 = ssub.s32 512, 512
      %22 = vsyncadd [#allocation3], %s21
      %s23 = sshll.u32 [#allocation2], 4
      %s24 = int_to_ptr.vmem [resolvable:$true] %s23
      %29 = dma.hbm_to_vmem [thread:$0]  %s0, 512, %s24, [#allocation3], 128, 128, 8
    $region5: #{tpu_custom_call.1} parent=1 // pred_fallthru
      _
    // Predicated region
    $region6: #{tpu_custom_call.1} parent=1 // pred_check
      _
    $region7: #{tpu_custom_call.1} parent=1 // pred_check_branch
      %31 = sbr.rel (0) target = $region9
    $region8: #{tpu_custom_call.1} parent=1 // pred_region
      %s33 = ssub.s32 6144, 6144
      %34 = vsyncadd [#allocation6], %s33
      %s35 = sshll.u32 [#allocation5], 4
      %s36 = int_to_ptr.vmem [resolvable:$true] %s35
      %41 = dma.hbm_to_vmem [thread:$0]  %s1, 6144, %s36, [#allocation6], 128, 128, 8
    $region9: #{tpu_custom_call.1} parent=1 // pred_fallthru
      _
    // Predicated region
    $region10: #{tpu_custom_call.1} parent=1 // pred_check
      _
    $region11: #{tpu_custom_call.1} parent=1 // pred_check_branch
      %43 = sbr.rel (0) target = $region13
    $region12: #{tpu_custom_call.1} parent=1 // pred_region
      _
    $region13: #{tpu_custom_call.1} parent=1 // pred_fallthru
      _
    // Predicated region
    $region14: #{tpu_custom_call.1} parent=1 // pred_check
      _
    $region15: #{tpu_custom_call.1} parent=1 // pred_check_branch
      %45 = sbr.rel (0) target = $region17
    $region16: #{tpu_custom_call.1} parent=1 // pred_region
      _
    $region17: #{tpu_custom_call.1} parent=1 // pred_fallthru
      _
    // Predicated region
    $region18: #{tpu_custom_call.1} parent=1 // pred_check
      _
    $region19: #{tpu_custom_call.1} parent=1 // pred_check_branch
      %47 = sbr.rel (0) target = $region21
    $region20: #{tpu_custom_call.1} parent=1 // pred_region
      %s49 = ssub.s32 6144, 6144
      %50 = vsyncadd [#allocation6], %s49
      %s51 = sshll.u32 [#allocation7], 4
      %s52 = int_to_ptr.vmem [resolvable:$true] %s51
      %57 = dma.hbm_to_vmem [thread:$0]  %s4, 6144, %s52, [#allocation6], 128, 128, 8
    $region21: #{tpu_custom_call.1} parent=1 // pred_fallthru
      _
    // Predicated region
    $region22: #{tpu_custom_call.1} parent=1 // pred_check
      _
    $region23: #{tpu_custom_call.1} parent=1 // pred_check_branch
      %59 = sbr.rel (0) target = $region25
    $region24: #{tpu_custom_call.1} parent=1 // pred_region
      _
    $region25: #{tpu_custom_call.1} parent=1 // pred_fallthru
      _
    // Predicated region
    $region26: #{tpu_custom_call.1} parent=1 // pred_check
      _
    $region27: #{tpu_custom_call.1} parent=1 // pred_check_branch
      %61 = sbr.rel (0) target = $region29
    $region28: #{tpu_custom_call.1} parent=1 // pred_region
      _
    $region29: #{tpu_custom_call.1} parent=1 // pred_fallthru
      _
    // Predicated region
    $region30: #{tpu_custom_call.1} parent=1 // pred_check
      _
    $region31: #{tpu_custom_call.1} parent=1 // pred_check_branch
      %63 = sbr.rel (0) target = $region33
    $region32: #{tpu_custom_call.1} parent=1 // pred_region
      %s65 = ssub.s32 2048, 2048
      %66 = vsyncadd [#allocation9], %s65
      %s67 = sshll.u32 [#allocation8], 4
      %s68 = int_to_ptr.vmem [resolvable:$true] %s67
      %73 = dma.hbm_to_vmem [thread:$0]  %s7, 2048, %s68, [#allocation9], 128, 128, 8
    $region33: #{tpu_custom_call.1} parent=1 // pred_fallthru
      _
    // Predicated region
    $region34: #{tpu_custom_call.1} parent=1 // pred_check
      _
    $region35: #{tpu_custom_call.1} parent=1 // pred_check_branch
      %75 = sbr.rel (0) target = $region37
    $region36: #{tpu_custom_call.1} parent=1 // pred_region
      %s77 = ssub.s32 1024, 1024
      %78 = vsyncadd [#allocation9], %s77
      %s79 = sshll.u32 [#allocation10], 4
      %s80 = int_to_ptr.vmem [resolvable:$true] %s79
      %85 = dma.hbm_to_vmem [thread:$0]  %s8, 1024, %s80, [#allocation9], 128, 128, 8
    $region37: #{tpu_custom_call.1} parent=1 // pred_fallthru
      _
    // Predicated region
    $region38: #{tpu_custom_call.1} parent=1 // pred_check
      _
    $region39: #{tpu_custom_call.1} parent=1 // pred_check_branch
      %87 = sbr.rel (0) target = $region41
    $region40: #{tpu_custom_call.1} parent=1 // pred_region
      %88 = dma.done [#allocation3], 512
    $region41: #{tpu_custom_call.1} parent=1 // pred_fallthru
      _
    // Predicated region
    $region42: #{tpu_custom_call.1} parent=1 // pred_check
      _
    $region43: #{tpu_custom_call.1} parent=1 // pred_check_branch
      %90 = sbr.rel (0) target = $region45
    $region44: #{tpu_custom_call.1} parent=1 // pred_region
      %91 = dma.done [#allocation6], 6144
    $region45: #{tpu_custom_call.1} parent=1 // pred_fallthru
      _
    // Predicated region
    $region46: #{tpu_custom_call.1} parent=1 // pred_check
      _
    $region47: #{tpu_custom_call.1} parent=1 // pred_check_branch
      %93 = sbr.rel (0) target = $region49
    $region48: #{tpu_custom_call.1} parent=1 // pred_region
      %94 = dma.done [#allocation6], 6144
    $region49: #{tpu_custom_call.1} parent=1 // pred_fallthru
      _
    // Predicated region
    $region50: #{tpu_custom_call.1} parent=1 // pred_check
      _
    $region51: #{tpu_custom_call.1} parent=1 // pred_check_branch
      %96 = sbr.rel (0) target = $region53
    $region52: #{tpu_custom_call.1} parent=1 // pred_region
      %97 = dma.done [#allocation9], 2048
    $region53: #{tpu_custom_call.1} parent=1 // pred_fallthru
      _
    // Predicated region
    $region54: #{tpu_custom_call.1} parent=1 // pred_check
      _
    $region55: #{tpu_custom_call.1} parent=1 // pred_check_branch
      %99 = sbr.rel (0) target = $region57
    $region56: #{tpu_custom_call.1} parent=1 // pred_region
      %100 = dma.done [#allocation9], 1024
    $region57: #{tpu_custom_call.1} parent=1 // pred_fallthru
      _
    %v101 = vld [vmem:[#allocation2] sm:$0xff]
    %v102 = vld [vmem:[#allocation2 + $0x8] sm:$0xff]
    %v103 = vld [vmem:[#allocation2 + $0x10] sm:$0xff]
    %v104 = vld [vmem:[#allocation2 + $0x18] sm:$0xff]
    %v105 = vld [vmem:[#allocation5] sm:$0xff]
    %v106 = vld [vmem:[#allocation5 + $0x8] sm:$0xff]
    %v107 = vld [vmem:[#allocation5 + $0x10] sm:$0xff]
    %v108 = vld [vmem:[#allocation5 + $0x18] sm:$0xff]
    %v109 = vld [vmem:[#allocation5 + $0x20] sm:$0xff]
    %v110 = vld [vmem:[#allocation5 + $0x28] sm:$0xff]
    %v111 = vld [vmem:[#allocation5 + $0x30] sm:$0xff]
    %v112 = vld [vmem:[#allocation5 + $0x38] sm:$0xff]
    %v113 = vld [vmem:[#allocation5 + $0x40] sm:$0xff]
    %v114 = vld [vmem:[#allocation5 + $0x48] sm:$0xff]
    %v115 = vld [vmem:[#allocation5 + $0x50] sm:$0xff]
    %v116 = vld [vmem:[#allocation5 + $0x58] sm:$0xff]
    %v117 = vld [vmem:[#allocation5 + $0x60] sm:$0xff]
    %v118 = vld [vmem:[#allocation5 + $0x68] sm:$0xff]
    %v119 = vld [vmem:[#allocation5 + $0x70] sm:$0xff]
    %v120 = vld [vmem:[#allocation5 + $0x78] sm:$0xff]
    %121 = vmatprep.subr.mxu0 0.0
    %122 = vmatpush1.msra.mxu0 %v120
    %123 = vmatprep.subr.mxu0 0.0
    %124 = vmatpush1.msra.mxu0 %v119
    %125 = vmatprep.subr.mxu0 0.0
    %126 = vmatpush1.msra.mxu0 %v118
    %127 = vmatprep.subr.mxu0 0.0
    %128 = vmatpush1.msra.mxu0 %v117
    %129 = vmatprep.subr.mxu0 0.0
    %130 = vmatpush1.msra.mxu0 %v116
    %131 = vmatprep.subr.mxu0 0.0
    %132 = vmatpush1.msra.mxu0 %v115
    %133 = vmatprep.subr.mxu0 0.0
    %134 = vmatpush1.msra.mxu0 %v114
    %135 = vmatprep.subr.mxu0 0.0
    %136 = vmatpush1.msra.mxu0 %v113
    %137 = vmatprep.subr.mxu0 0.0
    %138 = vmatpush1.msra.mxu0 %v112
    %139 = vmatprep.subr.mxu0 0.0
    %140 = vmatpush1.msra.mxu0 %v111
    %141 = vmatprep.subr.mxu0 0.0
    %142 = vmatpush1.msra.mxu0 %v110
    %143 = vmatprep.subr.mxu0 0.0
    %144 = vmatpush1.msra.mxu0 %v109
    %145 = vmatprep.subr.mxu0 0.0
    %146 = vmatpush1.msra.mxu0 %v108
    %147 = vmatprep.subr.mxu0 0.0
    %148 = vmatpush1.msra.mxu0 %v107
    %149 = vmatprep.subr.mxu0 0.0
    %150 = vmatpush1.msra.mxu0 %v106
    %151 = vmatprep.subr.mxu0 0.0
    %152 = vmatpush1.msra.mxu0 %v105
    %153 = vmatprep.subr.mxu0 0.0
    %154 = vmatpush2.msra.mxu0 0.0
    %155 = vmatprep.subr.mxu0 0.0
    %156 = vmatpush2.msra.mxu0 0.0
    %157 = vmatprep.subr.mxu0 0.0
    %158 = vmatpush2.msra.mxu0 0.0
    %159 = vmatprep.subr.mxu0 0.0
    %160 = vmatpush2.msra.mxu0 0.0
    %161 = vmatprep.subr.mxu0 0.0
    %162 = vmatpush2.msra.mxu0 0.0
    %163 = vmatprep.subr.mxu0 0.0
    %164 = vmatpush2.msra.mxu0 0.0
    %165 = vmatprep.subr.mxu0 0.0
    %166 = vmatpush2.msra.mxu0 0.0
    %167 = vmatprep.subr.mxu0 0.0
    %168 = vmatpush2.msra.mxu0 0.0
    %169 = vmatprep.subr.mxu0 0.0
    %170 = vmatpush2.msra.mxu0 0.0
    %171 = vmatprep.subr.mxu0 0.0
    %172 = vmatpush2.msra.mxu0 0.0
    %173 = vmatprep.subr.mxu0 0.0
    %174 = vmatpush2.msra.mxu0 0.0
    %175 = vmatprep.subr.mxu0 0.0
    %176 = vmatpush2.msra.mxu0 0.0
    %177 = vmatprep.subr.mxu0 0.0
    %178 = vmatpush2.msra.mxu0 0.0
    %179 = vmatprep.subr.mxu0 0.0
    %180 = vmatpush2.msra.mxu0 0.0
    %181 = vmatprep.subr.mxu0 0.0
    %182 = vmatpush2.msra.mxu0 0.0
    %183 = vmatprep.subr.mxu0 0.0
    %184 = vmatpush2.msra.mxu0 0.0
    %185 = vmatprep.mubr.f32.mxu0 0.0
    %186 = vmatmul.mubr.f32.gmra.mxu0 %v101
    %v187 = vpop.f32.mrf.mxu0
    %v188 = vadd.f32 0.0, %v187
    %v189 = vpop.f32.mrf.mxu0
    %190 = vmatprep.mubr.f32.mxu0 0.0
    %191 = vmatmul.mubr.f32.gmra.mxu0 %v102
    %v192 = vpop.f32.mrf.mxu0
    %v193 = vadd.f32 0.0, %v192
    %v194 = vpop.f32.mrf.mxu0
    %195 = vmatprep.mubr.f32.mxu0 0.0
    %196 = vmatmul.mubr.f32.gmra.mxu0 %v103
    %v197 = vpop.f32.mrf.mxu0
    %v198 = vadd.f32 0.0, %v197
    %v199 = vpop.f32.mrf.mxu0
    %200 = vmatprep.mubr.f32.mxu0 0.0
    %201 = vmatmul.mubr.f32.gmra.mxu0 %v104
    %v202 = vpop.f32.mrf.mxu0
    %v203 = vadd.f32 0.0, %v202
    %v204 = vpop.f32.mrf.mxu0
    %205 = vdwg.mxu0
    %s206 = scalar_lea.vmem [#allocation5], 128
    %v207 = vld [vmem:[%s206] sm:$0xff]
    %v208 = vld [vmem:[%s206 + $0x8] sm:$0xff]
    %v209 = vld [vmem:[%s206 + $0x10] sm:$0xff]
    %v210 = vld [vmem:[%s206 + $0x18] sm:$0xff]
    %v211 = vld [vmem:[%s206 + $0x20] sm:$0xff]
    %v212 = vld [vmem:[%s206 + $0x28] sm:$0xff]
    %v213 = vld [vmem:[%s206 + $0x30] sm:$0xff]
    %v214 = vld [vmem:[%s206 + $0x38] sm:$0xff]
    %v215 = vld [vmem:[%s206 + $0x40] sm:$0xff]
    %v216 = vld [vmem:[%s206 + $0x48] sm:$0xff]
    %v217 = vld [vmem:[%s206 + $0x50] sm:$0xff]
    %v218 = vld [vmem:[%s206 + $0x58] sm:$0xff]
    %v219 = vld [vmem:[%s206 + $0x60] sm:$0xff]
    %v220 = vld [vmem:[%s206 + $0x68] sm:$0xff]
    %v221 = vld [vmem:[%s206 + $0x70] sm:$0xff]
    %v222 = vld [vmem:[%s206 + $0x78] sm:$0xff]
    %s223 = scalar_lea.vmem [#allocation5], 256
    %v224 = vld [vmem:[%s223] sm:$0xff]
    %v225 = vld [vmem:[%s223 + $0x8] sm:$0xff]
    %v226 = vld [vmem:[%s223 + $0x10] sm:$0xff]
    %v227 = vld [vmem:[%s223 + $0x18] sm:$0xff]
    %v228 = vld [vmem:[%s223 + $0x20] sm:$0xff]
    %v229 = vld [vmem:[%s223 + $0x28] sm:$0xff]
    %v230 = vld [vmem:[%s223 + $0x30] sm:$0xff]
    %v231 = vld [vmem:[%s223 + $0x38] sm:$0xff]
    %v232 = vld [vmem:[%s223 + $0x40] sm:$0xff]
    %v233 = vld [vmem:[%s223 + $0x48] sm:$0xff]
    %v234 = vld [vmem:[%s223 + $0x50] sm:$0xff]
    %v235 = vld [vmem:[%s223 + $0x58] sm:$0xff]
    %v236 = vld [vmem:[%s223 + $0x60] sm:$0xff]
    %v237 = vld [vmem:[%s223 + $0x68] sm:$0xff]
    %v238 = vld [vmem:[%s223 + $0x70] sm:$0xff]
    %v239 = vld [vmem:[%s223 + $0x78] sm:$0xff]
    %240 = vmatprep.subr.mxu0 0.0
    %241 = vmatpush1.msra.mxu0 %v239
    %242 = vmatprep.subr.mxu0 0.0
    %243 = vmatpush1.msra.mxu0 %v238
    %244 = vmatprep.subr.mxu0 0.0
    %245 = vmatpush1.msra.mxu0 %v237
    %246 = vmatprep.subr.mxu0 0.0
    %247 = vmatpush1.msra.mxu0 %v236
    %248 = vmatprep.subr.mxu0 0.0
    %249 = vmatpush1.msra.mxu0 %v235
    %250 = vmatprep.subr.mxu0 0.0
    %251 = vmatpush1.msra.mxu0 %v234
    %252 = vmatprep.subr.mxu0 0.0
    %253 = vmatpush1.msra.mxu0 %v233
    %254 = vmatprep.subr.mxu0 0.0
    %255 = vmatpush1.msra.mxu0 %v232
    %256 = vmatprep.subr.mxu0 0.0
    %257 = vmatpush1.msra.mxu0 %v231
    %258 = vmatprep.subr.mxu0 0.0
    %259 = vmatpush1.msra.mxu0 %v230
    %260 = vmatprep.subr.mxu0 0.0
    %261 = vmatpush1.msra.mxu0 %v229
    %262 = vmatprep.subr.mxu0 0.0
    %263 = vmatpush1.msra.mxu0 %v228
    %264 = vmatprep.subr.mxu0 0.0
    %265 = vmatpush1.msra.mxu0 %v227
    %266 = vmatprep.subr.mxu0 0.0
    %267 = vmatpush1.msra.mxu0 %v226
    %268 = vmatprep.subr.mxu0 0.0
    %269 = vmatpush1.msra.mxu0 %v225
    %270 = vmatprep.subr.mxu0 0.0
    %271 = vmatpush1.msra.mxu0 %v224
    %272 = vmatprep.subr.mxu0 0.0
    %273 = vmatpush2.msra.mxu0 0.0
    %274 = vmatprep.subr.mxu0 0.0
    %275 = vmatpush2.msra.mxu0 0.0
    %276 = vmatprep.subr.mxu0 0.0
    %277 = vmatpush2.msra.mxu0 0.0
    %278 = vmatprep.subr.mxu0 0.0
    %279 = vmatpush2.msra.mxu0 0.0
    %280 = vmatprep.subr.mxu0 0.0
    %281 = vmatpush2.msra.mxu0 0.0
    %282 = vmatprep.subr.mxu0 0.0
    %283 = vmatpush2.msra.mxu0 0.0
    %284 = vmatprep.subr.mxu0 0.0
    %285 = vmatpush2.msra.mxu0 0.0
    %286 = vmatprep.subr.mxu0 0.0
    %287 = vmatpush2.msra.mxu0 0.0
    %288 = vmatprep.subr.mxu0 0.0
    %289 = vmatpush2.msra.mxu0 0.0
    %290 = vmatprep.subr.mxu0 0.0
    %291 = vmatpush2.msra.mxu0 0.0
    %292 = vmatprep.subr.mxu0 0.0
    %293 = vmatpush2.msra.mxu0 0.0
    %294 = vmatprep.subr.mxu0 0.0
    %295 = vmatpush2.msra.mxu0 0.0
    %296 = vmatprep.subr.mxu0 0.0
    %297 = vmatpush2.msra.mxu0 0.0
    %298 = vmatprep.subr.mxu0 0.0
    %299 = vmatpush2.msra.mxu0 0.0
    %300 = vmatprep.subr.mxu0 0.0
    %301 = vmatpush2.msra.mxu0 0.0
    %302 = vmatprep.subr.mxu0 0.0
    %303 = vmatpush2.msra.mxu0 0.0
    %304 = vmatprep.mubr.f32.mxu0 0.0
    %305 = vmatmul.mubr.f32.gmra.mxu0 %v101
    %v306 = vpop.f32.mrf.mxu0
    %v307 = vadd.f32 0.0, %v306
    %v308 = vpop.f32.mrf.mxu0
    %309 = vmatprep.mubr.f32.mxu0 0.0
    %310 = vmatmul.mubr.f32.gmra.mxu0 %v102
    %v311 = vpop.f32.mrf.mxu0
    %v312 = vadd.f32 0.0, %v311
    %v313 = vpop.f32.mrf.mxu0
    %314 = vmatprep.mubr.f32.mxu0 0.0
    %315 = vmatmul.mubr.f32.gmra.mxu0 %v103
    %v316 = vpop.f32.mrf.mxu0
    %v317 = vadd.f32 0.0, %v316
    %v318 = vpop.f32.mrf.mxu0
    %319 = vmatprep.mubr.f32.mxu0 0.0
    %320 = vmatmul.mubr.f32.gmra.mxu0 %v104
    %v321 = vpop.f32.mrf.mxu0
    %v322 = vadd.f32 0.0, %v321
    %v323 = vpop.f32.mrf.mxu0
    %324 = vdwg.mxu0
    %v325 = vld [vmem:[#allocation10] sm:$0xff]
    %v326 = vld [vmem:[#allocation10 + $0x8] sm:$0xff]
    %v327 = vld [vmem:[#allocation10 + $0x10] sm:$0xff]
    %v328 = vld [vmem:[#allocation10 + $0x18] sm:$0xff]
    %vm329 = vcmask 261120
    %v331 = vsel %vm329, %v325, 0
    %v334 = vsel %vm329, %v326, 0
    %v337 = vsel %vm329, %v327, 0
    %v340 = vsel %vm329, %v328, 0
    %342 = vmatprep.subr.mxu0 0.0
    %343 = vmatpush1.msra.mxu0 0.0
    %344 = vmatprep.subr.mxu0 0.0
    %345 = vmatpush1.msra.mxu0 0.0
    %346 = vmatprep.subr.mxu0 0.0
    %347 = vmatpush1.msra.mxu0 0.0
    %348 = vmatprep.subr.mxu0 0.0
    %349 = vmatpush1.msra.mxu0 0.0
    %350 = vmatprep.subr.mxu0 0.0
    %351 = vmatpush1.msra.mxu0 0.0
    %352 = vmatprep.subr.mxu0 0.0
    %353 = vmatpush1.msra.mxu0 0.0
    %354 = vmatprep.subr.mxu0 0.0
    %355 = vmatpush1.msra.mxu0 0.0
    %356 = vmatprep.subr.mxu0 0.0
    %357 = vmatpush1.msra.mxu0 0.0
    %358 = vmatprep.subr.mxu0 0.0
    %359 = vmatpush1.msra.mxu0 0.0
    %360 = vmatprep.subr.mxu0 0.0
    %361 = vmatpush1.msra.mxu0 0.0
    %362 = vmatprep.subr.mxu0 0.0
    %363 = vmatpush1.msra.mxu0 0.0
    %364 = vmatprep.subr.mxu0 0.0
    %365 = vmatpush1.msra.mxu0 0.0
    %366 = vmatprep.subr.mxu0 0.0
    %367 = vmatpush1.msra.mxu0 %v203
    %368 = vmatprep.subr.mxu0 0.0
    %369 = vmatpush1.msra.mxu0 %v198
    %370 = vmatprep.subr.mxu0 0.0
    %371 = vmatpush1.msra.mxu0 %v193
    %372 = vmatprep.subr.mxu0 0.0
    %373 = vmatpush1.msra.mxu0 %v188
    %374 = vmatprep.subr.mxu0 0.0
    %375 = vmatpush2.msra.mxu0 0.0
    %376 = vmatprep.subr.mxu0 0.0
    %377 = vmatpush2.msra.mxu0 0.0
    %378 = vmatprep.subr.mxu0 0.0
    %379 = vmatpush2.msra.mxu0 0.0
    %380 = vmatprep.subr.mxu0 0.0
    %381 = vmatpush2.msra.mxu0 0.0
    %382 = vmatprep.subr.mxu0 0.0
    %383 = vmatpush2.msra.mxu0 0.0
    %384 = vmatprep.subr.mxu0 0.0
    %385 = vmatpush2.msra.mxu0 0.0
    %386 = vmatprep.subr.mxu0 0.0
    %387 = vmatpush2.msra.mxu0 0.0
    %388 = vmatprep.subr.mxu0 0.0
    %389 = vmatpush2.msra.mxu0 0.0
    %390 = vmatprep.subr.mxu0 0.0
    %391 = vmatpush2.msra.mxu0 0.0
    %392 = vmatprep.subr.mxu0 0.0
    %393 = vmatpush2.msra.mxu0 0.0
    %394 = vmatprep.subr.mxu0 0.0
    %395 = vmatpush2.msra.mxu0 0.0
    %396 = vmatprep.subr.mxu0 0.0
    %397 = vmatpush2.msra.mxu0 0.0
    %398 = vmatprep.subr.mxu0 0.0
    %399 = vmatpush2.msra.mxu0 0.0
    %400 = vmatprep.subr.mxu0 0.0
    %401 = vmatpush2.msra.mxu0 0.0
    %402 = vmatprep.subr.mxu0 0.0
    %403 = vmatpush2.msra.mxu0 0.0
    %404 = vmatprep.subr.mxu0 0.0
    %405 = vmatpush2.msra.mxu0 0.0
    %406 = vmatprep.mubr.f32.mxu0 0.0
    %407 = vmatmul.mubr.f32.gmra.mxu0 %v331
    %v408 = vpop.f32.mrf.mxu0
    %v409 = vadd.f32 0.0, %v408
    %v410 = vpop.f32.mrf.mxu0
    %411 = vmatprep.mubr.f32.mxu0 0.0
    %412 = vmatmul.mubr.f32.gmra.mxu0 %v334
    %v413 = vpop.f32.mrf.mxu0
    %v414 = vadd.f32 0.0, %v413
    %v415 = vpop.f32.mrf.mxu0
    %416 = vmatprep.mubr.f32.mxu0 0.0
    %417 = vmatmul.mubr.f32.gmra.mxu0 %v337
    %v418 = vpop.f32.mrf.mxu0
    %v419 = vadd.f32 0.0, %v418
    %v420 = vpop.f32.mrf.mxu0
    %421 = vmatprep.mubr.f32.mxu0 0.0
    %422 = vmatmul.mubr.f32.gmra.mxu0 %v340
    %v423 = vpop.f32.mrf.mxu0
    %v424 = vadd.f32 0.0, %v423
    %v425 = vpop.f32.mrf.mxu0
    %426 = vdwg.mxu0
    %427 = vmatprep.subr.mxu0 0.0
    %428 = vmatpush1.msra.mxu0 %v222
    %429 = vmatprep.subr.mxu0 0.0
    %430 = vmatpush1.msra.mxu0 %v221
    %431 = vmatprep.subr.mxu0 0.0
    %432 = vmatpush1.msra.mxu0 %v220
    %433 = vmatprep.subr.mxu0 0.0
    %434 = vmatpush1.msra.mxu0 %v219
    %435 = vmatprep.subr.mxu0 0.0
    %436 = vmatpush1.msra.mxu0 %v218
    %437 = vmatprep.subr.mxu0 0.0
    %438 = vmatpush1.msra.mxu0 %v217
    %439 = vmatprep.subr.mxu0 0.0
    %440 = vmatpush1.msra.mxu0 %v216
    %441 = vmatprep.subr.mxu0 0.0
    %442 = vmatpush1.msra.mxu0 %v215
    %443 = vmatprep.subr.mxu0 0.0
    %444 = vmatpush1.msra.mxu0 %v214
    %445 = vmatprep.subr.mxu0 0.0
    %446 = vmatpush1.msra.mxu0 %v213
    %447 = vmatprep.subr.mxu0 0.0
    %448 = vmatpush1.msra.mxu0 %v212
    %449 = vmatprep.subr.mxu0 0.0
    %450 = vmatpush1.msra.mxu0 %v211
    %451 = vmatprep.subr.mxu0 0.0
    %452 = vmatpush1.msra.mxu0 %v210
    %453 = vmatprep.subr.mxu0 0.0
    %454 = vmatpush1.msra.mxu0 %v209
    %455 = vmatprep.subr.mxu0 0.0
    %456 = vmatpush1.msra.mxu0 %v208
    %457 = vmatprep.subr.mxu0 0.0
    %458 = vmatpush1.msra.mxu0 %v207
    %459 = vmatprep.subr.mxu0 0.0
    %460 = vmatpush2.msra.mxu0 0.0
    %461 = vmatprep.subr.mxu0 0.0
    %462 = vmatpush2.msra.mxu0 0.0
    %463 = vmatprep.subr.mxu0 0.0
    %464 = vmatpush2.msra.mxu0 0.0
    %465 = vmatprep.subr.mxu0 0.0
    %466 = vmatpush2.msra.mxu0 0.0
    %467 = vmatprep.subr.mxu0 0.0
    %468 = vmatpush2.msra.mxu0 0.0
    %469 = vmatprep.subr.mxu0 0.0
    %470 = vmatpush2.msra.mxu0 0.0
    %471 = vmatprep.subr.mxu0 0.0
    %472 = vmatpush2.msra.mxu0 0.0
    %473 = vmatprep.subr.mxu0 0.0
    %474 = vmatpush2.msra.mxu0 0.0
    %475 = vmatprep.subr.mxu0 0.0
    %476 = vmatpush2.msra.mxu0 0.0
    %477 = vmatprep.subr.mxu0 0.0
    %478 = vmatpush2.msra.mxu0 0.0
    %479 = vmatprep.subr.mxu0 0.0
    %480 = vmatpush2.msra.mxu0 0.0
    %481 = vmatprep.subr.mxu0 0.0
    %482 = vmatpush2.msra.mxu0 0.0
    %483 = vmatprep.subr.mxu0 0.0
    %484 = vmatpush2.msra.mxu0 0.0
    %485 = vmatprep.subr.mxu0 0.0
    %486 = vmatpush2.msra.mxu0 0.0
    %487 = vmatprep.subr.mxu0 0.0
    %488 = vmatpush2.msra.mxu0 0.0
    %489 = vmatprep.subr.mxu0 0.0
    %490 = vmatpush2.msra.mxu0 0.0
    %491 = vmatprep.mubr.f32.mxu0 0.0
    %492 = vmatmul.mubr.f32.gmra.mxu0 %v101
    %v493 = vpop.f32.mrf.mxu0
    %v494 = vadd.f32 %v409, %v493
    %v495 = vpop.f32.mrf.mxu0
    %496 = vmatprep.mubr.f32.mxu0 0.0
    %497 = vmatmul.mubr.f32.gmra.mxu0 %v102
    %v498 = vpop.f32.mrf.mxu0
    %v499 = vadd.f32 %v414, %v498
    %v500 = vpop.f32.mrf.mxu0
    %501 = vmatprep.mubr.f32.mxu0 0.0
    %502 = vmatmul.mubr.f32.gmra.mxu0 %v103
    %v503 = vpop.f32.mrf.mxu0
    %v504 = vadd.f32 %v419, %v503
    %v505 = vpop.f32.mrf.mxu0
    %506 = vmatprep.mubr.f32.mxu0 0.0
    %507 = vmatmul.mubr.f32.gmra.mxu0 %v104
    %v508 = vpop.f32.mrf.mxu0
    %v509 = vadd.f32 %v424, %v508
    %v510 = vpop.f32.mrf.mxu0
    %511 = vdwg.mxu0
    %s512 = scalar_lea.vmem [#allocation10], 32
    %v513 = vld [vmem:[%s512] sm:$0xff]
    %v514 = vld [vmem:[%s512 + $0x8] sm:$0xff]
    %v515 = vld [vmem:[%s512 + $0x10] sm:$0xff]
    %v516 = vld [vmem:[%s512 + $0x18] sm:$0xff]
    %v518 = vsel %vm329, %v513, 0
    %v521 = vsel %vm329, %v514, 0
    %v524 = vsel %vm329, %v515, 0
    %v527 = vsel %vm329, %v516, 0
    %529 = vmatprep.subr.mxu0 0.0
    %530 = vmatpush1.msra.mxu0 0.0
    %531 = vmatprep.subr.mxu0 0.0
    %532 = vmatpush1.msra.mxu0 0.0
    %533 = vmatprep.subr.mxu0 0.0
    %534 = vmatpush1.msra.mxu0 0.0
    %535 = vmatprep.subr.mxu0 0.0
    %536 = vmatpush1.msra.mxu0 0.0
    %537 = vmatprep.subr.mxu0 0.0
    %538 = vmatpush1.msra.mxu0 0.0
    %539 = vmatprep.subr.mxu0 0.0
    %540 = vmatpush1.msra.mxu0 0.0
    %541 = vmatprep.subr.mxu0 0.0
    %542 = vmatpush1.msra.mxu0 0.0
    %543 = vmatprep.subr.mxu0 0.0
    %544 = vmatpush1.msra.mxu0 0.0
    %545 = vmatprep.subr.mxu0 0.0
    %546 = vmatpush1.msra.mxu0 0.0
    %547 = vmatprep.subr.mxu0 0.0
    %548 = vmatpush1.msra.mxu0 0.0
    %549 = vmatprep.subr.mxu0 0.0
    %550 = vmatpush1.msra.mxu0 0.0
    %551 = vmatprep.subr.mxu0 0.0
    %552 = vmatpush1.msra.mxu0 0.0
    %553 = vmatprep.subr.mxu0 0.0
    %554 = vmatpush1.msra.mxu0 %v322
    %555 = vmatprep.subr.mxu0 0.0
    %556 = vmatpush1.msra.mxu0 %v317
    %557 = vmatprep.subr.mxu0 0.0
    %558 = vmatpush1.msra.mxu0 %v312
    %559 = vmatprep.subr.mxu0 0.0
    %560 = vmatpush1.msra.mxu0 %v307
    %561 = vmatprep.subr.mxu0 0.0
    %562 = vmatpush2.msra.mxu0 0.0
    %563 = vmatprep.subr.mxu0 0.0
    %564 = vmatpush2.msra.mxu0 0.0
    %565 = vmatprep.subr.mxu0 0.0
    %566 = vmatpush2.msra.mxu0 0.0
    %567 = vmatprep.subr.mxu0 0.0
    %568 = vmatpush2.msra.mxu0 0.0
    %569 = vmatprep.subr.mxu0 0.0
    %570 = vmatpush2.msra.mxu0 0.0
    %571 = vmatprep.subr.mxu0 0.0
    %572 = vmatpush2.msra.mxu0 0.0
    %573 = vmatprep.subr.mxu0 0.0
    %574 = vmatpush2.msra.mxu0 0.0
    %575 = vmatprep.subr.mxu0 0.0
    %576 = vmatpush2.msra.mxu0 0.0
    %577 = vmatprep.subr.mxu0 0.0
    %578 = vmatpush2.msra.mxu0 0.0
    %579 = vmatprep.subr.mxu0 0.0
    %580 = vmatpush2.msra.mxu0 0.0
    %581 = vmatprep.subr.mxu0 0.0
    %582 = vmatpush2.msra.mxu0 0.0
    %583 = vmatprep.subr.mxu0 0.0
    %584 = vmatpush2.msra.mxu0 0.0
    %585 = vmatprep.subr.mxu0 0.0
    %586 = vmatpush2.msra.mxu0 0.0
    %587 = vmatprep.subr.mxu0 0.0
    %588 = vmatpush2.msra.mxu0 0.0
    %589 = vmatprep.subr.mxu0 0.0
    %590 = vmatpush2.msra.mxu0 0.0
    %591 = vmatprep.subr.mxu0 0.0
    %592 = vmatpush2.msra.mxu0 0.0
    %593 = vmatprep.mubr.f32.mxu0 0.0
    %594 = vmatmul.mubr.f32.gmra.mxu0 %v518
    %v595 = vpop.f32.mrf.mxu0
    %v596 = vadd.f32 0.0, %v595
    %v597 = vpop.f32.mrf.mxu0
    %598 = vmatprep.mubr.f32.mxu0 0.0
    %599 = vmatmul.mubr.f32.gmra.mxu0 %v521
    %v600 = vpop.f32.mrf.mxu0
    %v601 = vadd.f32 0.0, %v600
    %v602 = vpop.f32.mrf.mxu0
    %603 = vmatprep.mubr.f32.mxu0 0.0
    %604 = vmatmul.mubr.f32.gmra.mxu0 %v524
    %v605 = vpop.f32.mrf.mxu0
    %v606 = vadd.f32 0.0, %v605
    %v607 = vpop.f32.mrf.mxu0
    %608 = vmatprep.mubr.f32.mxu0 0.0
    %609 = vmatmul.mubr.f32.gmra.mxu0 %v527
    %v610 = vpop.f32.mrf.mxu0
    %v611 = vadd.f32 0.0, %v610
    %v612 = vpop.f32.mrf.mxu0
    %613 = vdwg.mxu0
    %v614 = vadd.f32 %v494, %v596
    %v615 = vadd.f32 %v499, %v601
    %v616 = vadd.f32 %v504, %v606
    %v617 = vadd.f32 %v509, %v611
    %v618 = vadd.f32 %v614, %v615
    %v619 = vadd.f32 %v618, %v616
    %v620 = vadd.f32 %v619, %v617
    %v621 = vrot.slane %v620, 4
    %v622 = vadd.f32 %v620, %v621
    %v623 = vrot.slane %v622, 2
    %v624 = vadd.f32 %v622, %v623
    %v625 = vrot.slane %v624, 1
    %v626 = vadd.f32 %v624, %v625
    %v627 = vmul.f32 %v614, %v614
    %v628 = vmul.f32 %v615, %v615
    %v629 = vmul.f32 %v616, %v616
    %v630 = vmul.f32 %v617, %v617
    %v631 = vadd.f32 %v627, %v628
    %v632 = vadd.f32 %v631, %v629
    %v633 = vadd.f32 %v632, %v630
    %v634 = vrot.slane %v633, 4
    %v635 = vadd.f32 %v633, %v634
    %v636 = vrot.slane %v635, 2
    %v637 = vadd.f32 %v635, %v636
    %v638 = vrot.slane %v637, 1
    %v639 = vadd.f32 %v637, %v638
    %v640 = vld [vmem:[#allocation8] sm:$0xff]
    %v641 = vld [vmem:[#allocation8 + $0x8] sm:$0xff]
    %v642 = vld [vmem:[#allocation8 + $0x10] sm:$0xff]
    %v643 = vld [vmem:[#allocation8 + $0x18] sm:$0xff]
    %v644 = vld [vmem:[#allocation8 + $0x20] sm:$0xff]
    %v645 = vld [vmem:[#allocation8 + $0x28] sm:$0xff]
    %v646 = vld [vmem:[#allocation8 + $0x30] sm:$0xff]
    %v647 = vld [vmem:[#allocation8 + $0x38] sm:$0xff]
    %v648 = vld [vmem:[#allocation8 + $0x40] sm:$0xff]
    %v649 = vld [vmem:[#allocation8 + $0x48] sm:$0xff]
    %v650 = vld [vmem:[#allocation8 + $0x50] sm:$0xff]
    %v651 = vld [vmem:[#allocation8 + $0x58] sm:$0xff]
    %v652 = vld [vmem:[#allocation8 + $0x60] sm:$0xff]
    %v653 = vld [vmem:[#allocation8 + $0x68] sm:$0xff]
    %v654 = vld [vmem:[#allocation8 + $0x70] sm:$0xff]
    %v655 = vld [vmem:[#allocation8 + $0x78] sm:$0xff]
    %656 = vmatprep.subr.mxu0 0.0
    %657 = vmatpush1.msra.mxu0 %v655
    %658 = vmatprep.subr.mxu0 0.0
    %659 = vmatpush1.msra.mxu0 %v654
    %660 = vmatprep.subr.mxu0 0.0
    %661 = vmatpush1.msra.mxu0 %v653
    %662 = vmatprep.subr.mxu0 0.0
    %663 = vmatpush1.msra.mxu0 %v652
    %664 = vmatprep.subr.mxu0 0.0
    %665 = vmatpush1.msra.mxu0 %v651
    %666 = vmatprep.subr.mxu0 0.0
    %667 = vmatpush1.msra.mxu0 %v650
    %668 = vmatprep.subr.mxu0 0.0
    %669 = vmatpush1.msra.mxu0 %v649
    %670 = vmatprep.subr.mxu0 0.0
    %671 = vmatpush1.msra.mxu0 %v648
    %672 = vmatprep.subr.mxu0 0.0
    %673 = vmatpush1.msra.mxu0 %v647
    %674 = vmatprep.subr.mxu0 0.0
    %675 = vmatpush1.msra.mxu0 %v646
    %676 = vmatprep.subr.mxu0 0.0
    %677 = vmatpush1.msra.mxu0 %v645
    %678 = vmatprep.subr.mxu0 0.0
    %679 = vmatpush1.msra.mxu0 %v644
    %680 = vmatprep.subr.mxu0 0.0
    %681 = vmatpush1.msra.mxu0 %v643
    %682 = vmatprep.subr.mxu0 0.0
    %683 = vmatpush1.msra.mxu0 %v642
    %684 = vmatprep.subr.mxu0 0.0
    %685 = vmatpush1.msra.mxu0 %v641
    %686 = vmatprep.subr.mxu0 0.0
    %687 = vmatpush1.msra.mxu0 %v640
    %688 = vmatprep.subr.mxu0 0.0
    %689 = vmatpush2.msra.mxu0 0.0
    %690 = vmatprep.subr.mxu0 0.0
    %691 = vmatpush2.msra.mxu0 0.0
    %692 = vmatprep.subr.mxu0 0.0
    %693 = vmatpush2.msra.mxu0 0.0
    %694 = vmatprep.subr.mxu0 0.0
    %695 = vmatpush2.msra.mxu0 0.0
    %696 = vmatprep.subr.mxu0 0.0
    %697 = vmatpush2.msra.mxu0 0.0
    %698 = vmatprep.subr.mxu0 0.0
    %699 = vmatpush2.msra.mxu0 0.0
    %700 = vmatprep.subr.mxu0 0.0
    %701 = vmatpush2.msra.mxu0 0.0
    %702 = vmatprep.subr.mxu0 0.0
    %703 = vmatpush2.msra.mxu0 0.0
    %704 = vmatprep.subr.mxu0 0.0
    %705 = vmatpush2.msra.mxu0 0.0
    %706 = vmatprep.subr.mxu0 0.0
    %707 = vmatpush2.msra.mxu0 0.0
    %708 = vmatprep.subr.mxu0 0.0
    %709 = vmatpush2.msra.mxu0 0.0
    %710 = vmatprep.subr.mxu0 0.0
    %711 = vmatpush2.msra.mxu0 0.0
    %712 = vmatprep.subr.mxu0 0.0
    %713 = vmatpush2.msra.mxu0 0.0
    %714 = vmatprep.subr.mxu0 0.0
    %715 = vmatpush2.msra.mxu0 0.0
    %716 = vmatprep.subr.mxu0 0.0
    %717 = vmatpush2.msra.mxu0 0.0
    %718 = vmatprep.subr.mxu0 0.0
    %719 = vmatpush2.msra.mxu0 0.0
    %720 = vmatprep.mubr.f32.mxu0 0.0
    %721 = vmatmul.mubr.f32.gmra.mxu0 %v626
    %v722 = vpop.f32.mrf.mxu0
    %v723 = vadd.f32 0.0, %v722
    %v724 = vpop.f32.mrf.mxu0
    %725 = vdwg.mxu0
    %v726 = vmul.f32 %v723, 0.001953125
    %727 = vmatprep.subr.mxu0 0.0
    %728 = vmatpush1.msra.mxu0 %v655
    %729 = vmatprep.subr.mxu0 0.0
    %730 = vmatpush1.msra.mxu0 %v654
    %731 = vmatprep.subr.mxu0 0.0
    %732 = vmatpush1.msra.mxu0 %v653
    %733 = vmatprep.subr.mxu0 0.0
    %734 = vmatpush1.msra.mxu0 %v652
    %735 = vmatprep.subr.mxu0 0.0
    %736 = vmatpush1.msra.mxu0 %v651
    %737 = vmatprep.subr.mxu0 0.0
    %738 = vmatpush1.msra.mxu0 %v650
    %739 = vmatprep.subr.mxu0 0.0
    %740 = vmatpush1.msra.mxu0 %v649
    %741 = vmatprep.subr.mxu0 0.0
    %742 = vmatpush1.msra.mxu0 %v648
    %743 = vmatprep.subr.mxu0 0.0
    %744 = vmatpush1.msra.mxu0 %v647
    %745 = vmatprep.subr.mxu0 0.0
    %746 = vmatpush1.msra.mxu0 %v646
    %747 = vmatprep.subr.mxu0 0.0
    %748 = vmatpush1.msra.mxu0 %v645
    %749 = vmatprep.subr.mxu0 0.0
    %750 = vmatpush1.msra.mxu0 %v644
    %751 = vmatprep.subr.mxu0 0.0
    %752 = vmatpush1.msra.mxu0 %v643
    %753 = vmatprep.subr.mxu0 0.0
    %754 = vmatpush1.msra.mxu0 %v642
    %755 = vmatprep.subr.mxu0 0.0
    %756 = vmatpush1.msra.mxu0 %v641
    %757 = vmatprep.subr.mxu0 0.0
    %758 = vmatpush1.msra.mxu0 %v640
    %759 = vmatprep.subr.mxu0 0.0
    %760 = vmatpush2.msra.mxu0 0.0
    %761 = vmatprep.subr.mxu0 0.0
    %762 = vmatpush2.msra.mxu0 0.0
    %763 = vmatprep.subr.mxu0 0.0
    %764 = vmatpush2.msra.mxu0 0.0
    %765 = vmatprep.subr.mxu0 0.0
    %766 = vmatpush2.msra.mxu0 0.0
    %767 = vmatprep.subr.mxu0 0.0
    %768 = vmatpush2.msra.mxu0 0.0
    %769 = vmatprep.subr.mxu0 0.0
    %770 = vmatpush2.msra.mxu0 0.0
    %771 = vmatprep.subr.mxu0 0.0
    %772 = vmatpush2.msra.mxu0 0.0
    %773 = vmatprep.subr.mxu0 0.0
    %774 = vmatpush2.msra.mxu0 0.0
    %775 = vmatprep.subr.mxu0 0.0
    %776 = vmatpush2.msra.mxu0 0.0
    %777 = vmatprep.subr.mxu0 0.0
    %778 = vmatpush2.msra.mxu0 0.0
    %779 = vmatprep.subr.mxu0 0.0
    %780 = vmatpush2.msra.mxu0 0.0
    %781 = vmatprep.subr.mxu0 0.0
    %782 = vmatpush2.msra.mxu0 0.0
    %783 = vmatprep.subr.mxu0 0.0
    %784 = vmatpush2.msra.mxu0 0.0
    %785 = vmatprep.subr.mxu0 0.0
    %786 = vmatpush2.msra.mxu0 0.0
    %787 = vmatprep.subr.mxu0 0.0
    %788 = vmatpush2.msra.mxu0 0.0
    %789 = vmatprep.subr.mxu0 0.0
    %790 = vmatpush2.msra.mxu0 0.0
    %791 = vmatprep.mubr.f32.mxu0 0.0
    %792 = vmatmul.mubr.f32.gmra.mxu0 %v639
    %v793 = vpop.f32.mrf.mxu0
    %v794 = vadd.f32 0.0, %v793
    %v795 = vpop.f32.mrf.mxu0
    %796 = vdwg.mxu0
    %v797 = vmul.f32 %v794, 0.001953125
    %v798 = vmul.f32 %v726, %v726
    %v799 = vsub.f32 %v797, %v798
    %v800 = vld [vmem:[%s2] sm:$0x1]
    %v801 = vadd.f32 %v799, 1e-05
    %v802 = vrsqrt.pop %v801
    %v803 = vmul.f32 %v800, %v802
    %v804 = vld [vmem:[%s3] sm:$0x1]
    %v805 = vmul.f32 %v726, %v803
    %v806 = vsub.f32 %v804, %v805
    %v808 = vlaneseq
    %v809 = vshrl.u32 %v808, 7
    %v810 = vsub.s32 0, %v809
    %v811 = vrot.slane %v803, %v810
    %v813 = vmul.f32 %v614, %v811
    %v814 = vmul.f32 %v615, %v811
    %v815 = vmul.f32 %v616, %v811
    %v816 = vmul.f32 %v617, %v811
    %v818 = vlaneseq
    %v819 = vshrl.u32 %v818, 7
    %v820 = vsub.s32 0, %v819
    %v821 = vrot.slane %v806, %v820
    %v823 = vadd.f32 %v813, %v821
    %v824 = vadd.f32 %v814, %v821
    %v825 = vadd.f32 %v815, %v821
    %v826 = vadd.f32 %v816, %v821
    %v827 = vmax.f32 %v823, 0.0
    %v828 = vmax.f32 %v824, 0.0
    %v829 = vmax.f32 %v825, 0.0
    %v830 = vmax.f32 %v826, 0.0
    %v831 = vld [vmem:[#allocation7] sm:$0xff]
    %v832 = vld [vmem:[#allocation7 + $0x8] sm:$0xff]
    %v833 = vld [vmem:[#allocation7 + $0x10] sm:$0xff]
    %v834 = vld [vmem:[#allocation7 + $0x18] sm:$0xff]
    %v835 = vld [vmem:[#allocation7 + $0x20] sm:$0xff]
    %v836 = vld [vmem:[#allocation7 + $0x28] sm:$0xff]
    %v837 = vld [vmem:[#allocation7 + $0x30] sm:$0xff]
    %v838 = vld [vmem:[#allocation7 + $0x38] sm:$0xff]
    %v839 = vld [vmem:[#allocation7 + $0x40] sm:$0xff]
    %v840 = vld [vmem:[#allocation7 + $0x48] sm:$0xff]
    %v841 = vld [vmem:[#allocation7 + $0x50] sm:$0xff]
    %v842 = vld [vmem:[#allocation7 + $0x58] sm:$0xff]
    %v843 = vld [vmem:[#allocation7 + $0x60] sm:$0xff]
    %v844 = vld [vmem:[#allocation7 + $0x68] sm:$0xff]
    %v845 = vld [vmem:[#allocation7 + $0x70] sm:$0xff]
    %v846 = vld [vmem:[#allocation7 + $0x78] sm:$0xff]
    %847 = vmatprep.subr.mxu0 0.0
    %848 = vmatpush1.msra.mxu0 %v846
    %849 = vmatprep.subr.mxu0 0.0
    %850 = vmatpush1.msra.mxu0 %v845
    %851 = vmatprep.subr.mxu0 0.0
    %852 = vmatpush1.msra.mxu0 %v844
    %853 = vmatprep.subr.mxu0 0.0
    %854 = vmatpush1.msra.mxu0 %v843
    %855 = vmatprep.subr.mxu0 0.0
    %856 = vmatpush1.msra.mxu0 %v842
    %857 = vmatprep.subr.mxu0 0.0
    %858 = vmatpush1.msra.mxu0 %v841
    %859 = vmatprep.subr.mxu0 0.0
    %860 = vmatpush1.msra.mxu0 %v840
    %861 = vmatprep.subr.mxu0 0.0
    %862 = vmatpush1.msra.mxu0 %v839
    %863 = vmatprep.subr.mxu0 0.0
    %864 = vmatpush1.msra.mxu0 %v838
    %865 = vmatprep.subr.mxu0 0.0
    %866 = vmatpush1.msra.mxu0 %v837
    %867 = vmatprep.subr.mxu0 0.0
    %868 = vmatpush1.msra.mxu0 %v836
    %869 = vmatprep.subr.mxu0 0.0
    %870 = vmatpush1.msra.mxu0 %v835
    %871 = vmatprep.subr.mxu0 0.0
    %872 = vmatpush1.msra.mxu0 %v834
    %873 = vmatprep.subr.mxu0 0.0
    %874 = vmatpush1.msra.mxu0 %v833
    %875 = vmatprep.subr.mxu0 0.0
    %876 = vmatpush1.msra.mxu0 %v832
    %877 = vmatprep.subr.mxu0 0.0
    %878 = vmatpush1.msra.mxu0 %v831
    %879 = vmatprep.subr.mxu0 0.0
    %880 = vmatpush2.msra.mxu0 0.0
    %881 = vmatprep.subr.mxu0 0.0
    %882 = vmatpush2.msra.mxu0 0.0
    %883 = vmatprep.subr.mxu0 0.0
    %884 = vmatpush2.msra.mxu0 0.0
    %885 = vmatprep.subr.mxu0 0.0
    %886 = vmatpush2.msra.mxu0 0.0
    %887 = vmatprep.subr.mxu0 0.0
    %888 = vmatpush2.msra.mxu0 0.0
    %889 = vmatprep.subr.mxu0 0.0
    %890 = vmatpush2.msra.mxu0 0.0
    %891 = vmatprep.subr.mxu0 0.0
    %892 = vmatpush2.msra.mxu0 0.0
    %893 = vmatprep.subr.mxu0 0.0
    %894 = vmatpush2.msra.mxu0 0.0
    %895 = vmatprep.subr.mxu0 0.0
    %896 = vmatpush2.msra.mxu0 0.0
    %897 = vmatprep.subr.mxu0 0.0
    %898 = vmatpush2.msra.mxu0 0.0
    %899 = vmatprep.subr.mxu0 0.0
    %900 = vmatpush2.msra.mxu0 0.0
    %901 = vmatprep.subr.mxu0 0.0
    %902 = vmatpush2.msra.mxu0 0.0
    %903 = vmatprep.subr.mxu0 0.0
    %904 = vmatpush2.msra.mxu0 0.0
    %905 = vmatprep.subr.mxu0 0.0
    %906 = vmatpush2.msra.mxu0 0.0
    %907 = vmatprep.subr.mxu0 0.0
    %908 = vmatpush2.msra.mxu0 0.0
    %909 = vmatprep.subr.mxu0 0.0
    %910 = vmatpush2.msra.mxu0 0.0
    %911 = vmatprep.mubr.f32.mxu0 0.0
    %912 = vmatmul.mubr.f32.gmra.mxu0 %v827
    %v913 = vpop.f32.mrf.mxu0
    %v914 = vadd.f32 0.0, %v913
    %v915 = vpop.f32.mrf.mxu0
    %916 = vmatprep.mubr.f32.mxu0 0.0
    %917 = vmatmul.mubr.f32.gmra.mxu0 %v828
    %v918 = vpop.f32.mrf.mxu0
    %v919 = vadd.f32 0.0, %v918
    %v920 = vpop.f32.mrf.mxu0
    %921 = vmatprep.mubr.f32.mxu0 0.0
    %922 = vmatmul.mubr.f32.gmra.mxu0 %v829
    %v923 = vpop.f32.mrf.mxu0
    %v924 = vadd.f32 0.0, %v923
    %v925 = vpop.f32.mrf.mxu0
    %926 = vmatprep.mubr.f32.mxu0 0.0
    %927 = vmatmul.mubr.f32.gmra.mxu0 %v830
    %v928 = vpop.f32.mrf.mxu0
    %v929 = vadd.f32 0.0, %v928
    %v930 = vpop.f32.mrf.mxu0
    %931 = vdwg.mxu0
    %s932 = scalar_lea.vmem [#allocation7], 128
    %v933 = vld [vmem:[%s932] sm:$0xff]
    %v934 = vld [vmem:[%s932 + $0x8] sm:$0xff]
    %v935 = vld [vmem:[%s932 + $0x10] sm:$0xff]
    %v936 = vld [vmem:[%s932 + $0x18] sm:$0xff]
    %v937 = vld [vmem:[%s932 + $0x20] sm:$0xff]
    %v938 = vld [vmem:[%s932 + $0x28] sm:$0xff]
    %v939 = vld [vmem:[%s932 + $0x30] sm:$0xff]
    %v940 = vld [vmem:[%s932 + $0x38] sm:$0xff]
    %v941 = vld [vmem:[%s932 + $0x40] sm:$0xff]
    %v942 = vld [vmem:[%s932 + $0x48] sm:$0xff]
    %v943 = vld [vmem:[%s932 + $0x50] sm:$0xff]
    %v944 = vld [vmem:[%s932 + $0x58] sm:$0xff]
    %v945 = vld [vmem:[%s932 + $0x60] sm:$0xff]
    %v946 = vld [vmem:[%s932 + $0x68] sm:$0xff]
    %v947 = vld [vmem:[%s932 + $0x70] sm:$0xff]
    %v948 = vld [vmem:[%s932 + $0x78] sm:$0xff]
    %s949 = scalar_lea.vmem [#allocation7], 256
    %v950 = vld [vmem:[%s949] sm:$0xff]
    %v951 = vld [vmem:[%s949 + $0x8] sm:$0xff]
    %v952 = vld [vmem:[%s949 + $0x10] sm:$0xff]
    %v953 = vld [vmem:[%s949 + $0x18] sm:$0xff]
    %v954 = vld [vmem:[%s949 + $0x20] sm:$0xff]
    %v955 = vld [vmem:[%s949 + $0x28] sm:$0xff]
    %v956 = vld [vmem:[%s949 + $0x30] sm:$0xff]
    %v957 = vld [vmem:[%s949 + $0x38] sm:$0xff]
    %v958 = vld [vmem:[%s949 + $0x40] sm:$0xff]
    %v959 = vld [vmem:[%s949 + $0x48] sm:$0xff]
    %v960 = vld [vmem:[%s949 + $0x50] sm:$0xff]
    %v961 = vld [vmem:[%s949 + $0x58] sm:$0xff]
    %v962 = vld [vmem:[%s949 + $0x60] sm:$0xff]
    %v963 = vld [vmem:[%s949 + $0x68] sm:$0xff]
    %v964 = vld [vmem:[%s949 + $0x70] sm:$0xff]
    %v965 = vld [vmem:[%s949 + $0x78] sm:$0xff]
    %966 = vmatprep.subr.mxu0 0.0
    %967 = vmatpush1.msra.mxu0 %v965
    %968 = vmatprep.subr.mxu0 0.0
    %969 = vmatpush1.msra.mxu0 %v964
    %970 = vmatprep.subr.mxu0 0.0
    %971 = vmatpush1.msra.mxu0 %v963
    %972 = vmatprep.subr.mxu0 0.0
    %973 = vmatpush1.msra.mxu0 %v962
    %974 = vmatprep.subr.mxu0 0.0
    %975 = vmatpush1.msra.mxu0 %v961
    %976 = vmatprep.subr.mxu0 0.0
    %977 = vmatpush1.msra.mxu0 %v960
    %978 = vmatprep.subr.mxu0 0.0
    %979 = vmatpush1.msra.mxu0 %v959
    %980 = vmatprep.subr.mxu0 0.0
    %981 = vmatpush1.msra.mxu0 %v958
    %982 = vmatprep.subr.mxu0 0.0
    %983 = vmatpush1.msra.mxu0 %v957
    %984 = vmatprep.subr.mxu0 0.0
    %985 = vmatpush1.msra.mxu0 %v956
    %986 = vmatprep.subr.mxu0 0.0
    %987 = vmatpush1.msra.mxu0 %v955
    %988 = vmatprep.subr.mxu0 0.0
    %989 = vmatpush1.msra.mxu0 %v954
    %990 = vmatprep.subr.mxu0 0.0
    %991 = vmatpush1.msra.mxu0 %v953
    %992 = vmatprep.subr.mxu0 0.0
    %993 = vmatpush1.msra.mxu0 %v952
    %994 = vmatprep.subr.mxu0 0.0
    %995 = vmatpush1.msra.mxu0 %v951
    %996 = vmatprep.subr.mxu0 0.0
    %997 = vmatpush1.msra.mxu0 %v950
    %998 = vmatprep.subr.mxu0 0.0
    %999 = vmatpush2.msra.mxu0 0.0
    %1000 = vmatprep.subr.mxu0 0.0
    %1001 = vmatpush2.msra.mxu0 0.0
    %1002 = vmatprep.subr.mxu0 0.0
    %1003 = vmatpush2.msra.mxu0 0.0
    %1004 = vmatprep.subr.mxu0 0.0
    %1005 = vmatpush2.msra.mxu0 0.0
    %1006 = vmatprep.subr.mxu0 0.0
    %1007 = vmatpush2.msra.mxu0 0.0
    %1008 = vmatprep.subr.mxu0 0.0
    %1009 = vmatpush2.msra.mxu0 0.0
    %1010 = vmatprep.subr.mxu0 0.0
    %1011 = vmatpush2.msra.mxu0 0.0
    %1012 = vmatprep.subr.mxu0 0.0
    %1013 = vmatpush2.msra.mxu0 0.0
    %1014 = vmatprep.subr.mxu0 0.0
    %1015 = vmatpush2.msra.mxu0 0.0
    %1016 = vmatprep.subr.mxu0 0.0
    %1017 = vmatpush2.msra.mxu0 0.0
    %1018 = vmatprep.subr.mxu0 0.0
    %1019 = vmatpush2.msra.mxu0 0.0
    %1020 = vmatprep.subr.mxu0 0.0
    %1021 = vmatpush2.msra.mxu0 0.0
    %1022 = vmatprep.subr.mxu0 0.0
    %1023 = vmatpush2.msra.mxu0 0.0
    %1024 = vmatprep.subr.mxu0 0.0
    %1025 = vmatpush2.msra.mxu0 0.0
    %1026 = vmatprep.subr.mxu0 0.0
    %1027 = vmatpush2.msra.mxu0 0.0
    %1028 = vmatprep.subr.mxu0 0.0
    %1029 = vmatpush2.msra.mxu0 0.0
    %1030 = vmatprep.mubr.f32.mxu0 0.0
    %1031 = vmatmul.mubr.f32.gmra.mxu0 %v827
    %v1032 = vpop.f32.mrf.mxu0
    %v1033 = vadd.f32 0.0, %v1032
    %v1034 = vpop.f32.mrf.mxu0
    %1035 = vmatprep.mubr.f32.mxu0 0.0
    %1036 = vmatmul.mubr.f32.gmra.mxu0 %v828
    %v1037 = vpop.f32.mrf.mxu0
    %v1038 = vadd.f32 0.0, %v1037
    %v1039 = vpop.f32.mrf.mxu0
    %1040 = vmatprep.mubr.f32.mxu0 0.0
    %1041 = vmatmul.mubr.f32.gmra.mxu0 %v829
    %v1042 = vpop.f32.mrf.mxu0
    %v1043 = vadd.f32 0.0, %v1042
    %v1044 = vpop.f32.mrf.mxu0
    %1045 = vmatprep.mubr.f32.mxu0 0.0
    %1046 = vmatmul.mubr.f32.gmra.mxu0 %v830
    %v1047 = vpop.f32.mrf.mxu0
    %v1048 = vadd.f32 0.0, %v1047
    %v1049 = vpop.f32.mrf.mxu0
    %1050 = vdwg.mxu0
    %1051 = vmatprep.subr.mxu0 0.0
    %1052 = vmatpush1.msra.mxu0 0.0
    %1053 = vmatprep.subr.mxu0 0.0
    %1054 = vmatpush1.msra.mxu0 0.0
    %1055 = vmatprep.subr.mxu0 0.0
    %1056 = vmatpush1.msra.mxu0 0.0
    %1057 = vmatprep.subr.mxu0 0.0
    %1058 = vmatpush1.msra.mxu0 0.0
    %1059 = vmatprep.subr.mxu0 0.0
    %1060 = vmatpush1.msra.mxu0 0.0
    %1061 = vmatprep.subr.mxu0 0.0
    %1062 = vmatpush1.msra.mxu0 0.0
    %1063 = vmatprep.subr.mxu0 0.0
    %1064 = vmatpush1.msra.mxu0 0.0
    %1065 = vmatprep.subr.mxu0 0.0
    %1066 = vmatpush1.msra.mxu0 0.0
    %1067 = vmatprep.subr.mxu0 0.0
    %1068 = vmatpush1.msra.mxu0 0.0
    %1069 = vmatprep.subr.mxu0 0.0
    %1070 = vmatpush1.msra.mxu0 0.0
    %1071 = vmatprep.subr.mxu0 0.0
    %1072 = vmatpush1.msra.mxu0 0.0
    %1073 = vmatprep.subr.mxu0 0.0
    %1074 = vmatpush1.msra.mxu0 0.0
    %1075 = vmatprep.subr.mxu0 0.0
    %1076 = vmatpush1.msra.mxu0 %v929
    %1077 = vmatprep.subr.mxu0 0.0
    %1078 = vmatpush1.msra.mxu0 %v924
    %1079 = vmatprep.subr.mxu0 0.0
    %1080 = vmatpush1.msra.mxu0 %v919
    %1081 = vmatprep.subr.mxu0 0.0
    %1082 = vmatpush1.msra.mxu0 %v914
    %1083 = vmatprep.subr.mxu0 0.0
    %1084 = vmatpush2.msra.mxu0 0.0
    %1085 = vmatprep.subr.mxu0 0.0
    %1086 = vmatpush2.msra.mxu0 0.0
    %1087 = vmatprep.subr.mxu0 0.0
    %1088 = vmatpush2.msra.mxu0 0.0
    %1089 = vmatprep.subr.mxu0 0.0
    %1090 = vmatpush2.msra.mxu0 0.0
    %1091 = vmatprep.subr.mxu0 0.0
    %1092 = vmatpush2.msra.mxu0 0.0
    %1093 = vmatprep.subr.mxu0 0.0
    %1094 = vmatpush2.msra.mxu0 0.0
    %1095 = vmatprep.subr.mxu0 0.0
    %1096 = vmatpush2.msra.mxu0 0.0
    %1097 = vmatprep.subr.mxu0 0.0
    %1098 = vmatpush2.msra.mxu0 0.0
    %1099 = vmatprep.subr.mxu0 0.0
    %1100 = vmatpush2.msra.mxu0 0.0
    %1101 = vmatprep.subr.mxu0 0.0
    %1102 = vmatpush2.msra.mxu0 0.0
    %1103 = vmatprep.subr.mxu0 0.0
    %1104 = vmatpush2.msra.mxu0 0.0
    %1105 = vmatprep.subr.mxu0 0.0
    %1106 = vmatpush2.msra.mxu0 0.0
    %1107 = vmatprep.subr.mxu0 0.0
    %1108 = vmatpush2.msra.mxu0 0.0
    %1109 = vmatprep.subr.mxu0 0.0
    %1110 = vmatpush2.msra.mxu0 0.0
    %1111 = vmatprep.subr.mxu0 0.0
    %1112 = vmatpush2.msra.mxu0 0.0
    %1113 = vmatprep.subr.mxu0 0.0
    %1114 = vmatpush2.msra.mxu0 0.0
    %1115 = vmatprep.mubr.f32.mxu0 0.0
    %1116 = vmatmul.mubr.f32.gmra.mxu0 %v331
    %v1117 = vpop.f32.mrf.mxu0
    %v1118 = vadd.f32 0.0, %v1117
    %v1119 = vpop.f32.mrf.mxu0
    %1120 = vmatprep.mubr.f32.mxu0 0.0
    %1121 = vmatmul.mubr.f32.gmra.mxu0 %v334
    %v1122 = vpop.f32.mrf.mxu0
    %v1123 = vadd.f32 0.0, %v1122
    %v1124 = vpop.f32.mrf.mxu0
    %1125 = vmatprep.mubr.f32.mxu0 0.0
    %1126 = vmatmul.mubr.f32.gmra.mxu0 %v337
    %v1127 = vpop.f32.mrf.mxu0
    %v1128 = vadd.f32 0.0, %v1127
    %v1129 = vpop.f32.mrf.mxu0
    %1130 = vmatprep.mubr.f32.mxu0 0.0
    %1131 = vmatmul.mubr.f32.gmra.mxu0 %v340
    %v1132 = vpop.f32.mrf.mxu0
    %v1133 = vadd.f32 0.0, %v1132
    %v1134 = vpop.f32.mrf.mxu0
    %1135 = vdwg.mxu0
    %1136 = vmatprep.subr.mxu0 0.0
    %1137 = vmatpush1.msra.mxu0 %v948
    %1138 = vmatprep.subr.mxu0 0.0
    %1139 = vmatpush1.msra.mxu0 %v947
    %1140 = vmatprep.subr.mxu0 0.0
    %1141 = vmatpush1.msra.mxu0 %v946
    %1142 = vmatprep.subr.mxu0 0.0
    %1143 = vmatpush1.msra.mxu0 %v945
    %1144 = vmatprep.subr.mxu0 0.0
    %1145 = vmatpush1.msra.mxu0 %v944
    %1146 = vmatprep.subr.mxu0 0.0
    %1147 = vmatpush1.msra.mxu0 %v943
    %1148 = vmatprep.subr.mxu0 0.0
    %1149 = vmatpush1.msra.mxu0 %v942
    %1150 = vmatprep.subr.mxu0 0.0
    %1151 = vmatpush1.msra.mxu0 %v941
    %1152 = vmatprep.subr.mxu0 0.0
    %1153 = vmatpush1.msra.mxu0 %v940
    %1154 = vmatprep.subr.mxu0 0.0
    %1155 = vmatpush1.msra.mxu0 %v939
    %1156 = vmatprep.subr.mxu0 0.0
    %1157 = vmatpush1.msra.mxu0 %v938
    %1158 = vmatprep.subr.mxu0 0.0
    %1159 = vmatpush1.msra.mxu0 %v937
    %1160 = vmatprep.subr.mxu0 0.0
    %1161 = vmatpush1.msra.mxu0 %v936
    %1162 = vmatprep.subr.mxu0 0.0
    %1163 = vmatpush1.msra.mxu0 %v935
    %1164 = vmatprep.subr.mxu0 0.0
    %1165 = vmatpush1.msra.mxu0 %v934
    %1166 = vmatprep.subr.mxu0 0.0
    %1167 = vmatpush1.msra.mxu0 %v933
    %1168 = vmatprep.subr.mxu0 0.0
    %1169 = vmatpush2.msra.mxu0 0.0
    %1170 = vmatprep.subr.mxu0 0.0
    %1171 = vmatpush2.msra.mxu0 0.0
    %1172 = vmatprep.subr.mxu0 0.0
    %1173 = vmatpush2.msra.mxu0 0.0
    %1174 = vmatprep.subr.mxu0 0.0
    %1175 = vmatpush2.msra.mxu0 0.0
    %1176 = vmatprep.subr.mxu0 0.0
    %1177 = vmatpush2.msra.mxu0 0.0
    %1178 = vmatprep.subr.mxu0 0.0
    %1179 = vmatpush2.msra.mxu0 0.0
    %1180 = vmatprep.subr.mxu0 0.0
    %1181 = vmatpush2.msra.mxu0 0.0
    %1182 = vmatprep.subr.mxu0 0.0
    %1183 = vmatpush2.msra.mxu0 0.0
    %1184 = vmatprep.subr.mxu0 0.0
    %1185 = vmatpush2.msra.mxu0 0.0
    %1186 = vmatprep.subr.mxu0 0.0
    %1187 = vmatpush2.msra.mxu0 0.0
    %1188 = vmatprep.subr.mxu0 0.0
    %1189 = vmatpush2.msra.mxu0 0.0
    %1190 = vmatprep.subr.mxu0 0.0
    %1191 = vmatpush2.msra.mxu0 0.0
    %1192 = vmatprep.subr.mxu0 0.0
    %1193 = vmatpush2.msra.mxu0 0.0
    %1194 = vmatprep.subr.mxu0 0.0
    %1195 = vmatpush2.msra.mxu0 0.0
    %1196 = vmatprep.subr.mxu0 0.0
    %1197 = vmatpush2.msra.mxu0 0.0
    %1198 = vmatprep.subr.mxu0 0.0
    %1199 = vmatpush2.msra.mxu0 0.0
    %1200 = vmatprep.mubr.f32.mxu0 0.0
    %1201 = vmatmul.mubr.f32.gmra.mxu0 %v827
    %v1202 = vpop.f32.mrf.mxu0
    %v1203 = vadd.f32 %v1118, %v1202
    %v1204 = vpop.f32.mrf.mxu0
    %1205 = vmatprep.mubr.f32.mxu0 0.0
    %1206 = vmatmul.mubr.f32.gmra.mxu0 %v828
    %v1207 = vpop.f32.mrf.mxu0
    %v1208 = vadd.f32 %v1123, %v1207
    %v1209 = vpop.f32.mrf.mxu0
    %1210 = vmatprep.mubr.f32.mxu0 0.0
    %1211 = vmatmul.mubr.f32.gmra.mxu0 %v829
    %v1212 = vpop.f32.mrf.mxu0
    %v1213 = vadd.f32 %v1128, %v1212
    %v1214 = vpop.f32.mrf.mxu0
    %1215 = vmatprep.mubr.f32.mxu0 0.0
    %1216 = vmatmul.mubr.f32.gmra.mxu0 %v830
    %v1217 = vpop.f32.mrf.mxu0
    %v1218 = vadd.f32 %v1133, %v1217
    %v1219 = vpop.f32.mrf.mxu0
    %1220 = vdwg.mxu0
    %1221 = vmatprep.subr.mxu0 0.0
    %1222 = vmatpush1.msra.mxu0 0.0
    %1223 = vmatprep.subr.mxu0 0.0
    %1224 = vmatpush1.msra.mxu0 0.0
    %1225 = vmatprep.subr.mxu0 0.0
    %1226 = vmatpush1.msra.mxu0 0.0
    %1227 = vmatprep.subr.mxu0 0.0
    %1228 = vmatpush1.msra.mxu0 0.0
    %1229 = vmatprep.subr.mxu0 0.0
    %1230 = vmatpush1.msra.mxu0 0.0
    %1231 = vmatprep.subr.mxu0 0.0
    %1232 = vmatpush1.msra.mxu0 0.0
    %1233 = vmatprep.subr.mxu0 0.0
    %1234 = vmatpush1.msra.mxu0 0.0
    %1235 = vmatprep.subr.mxu0 0.0
    %1236 = vmatpush1.msra.mxu0 0.0
    %1237 = vmatprep.subr.mxu0 0.0
    %1238 = vmatpush1.msra.mxu0 0.0
    %1239 = vmatprep.subr.mxu0 0.0
    %1240 = vmatpush1.msra.mxu0 0.0
    %1241 = vmatprep.subr.mxu0 0.0
    %1242 = vmatpush1.msra.mxu0 0.0
    %1243 = vmatprep.subr.mxu0 0.0
    %1244 = vmatpush1.msra.mxu0 0.0
    %1245 = vmatprep.subr.mxu0 0.0
    %1246 = vmatpush1.msra.mxu0 %v1048
    %1247 = vmatprep.subr.mxu0 0.0
    %1248 = vmatpush1.msra.mxu0 %v1043
    %1249 = vmatprep.subr.mxu0 0.0
    %1250 = vmatpush1.msra.mxu0 %v1038
    %1251 = vmatprep.subr.mxu0 0.0
    %1252 = vmatpush1.msra.mxu0 %v1033
    %1253 = vmatprep.subr.mxu0 0.0
    %1254 = vmatpush2.msra.mxu0 0.0
    %1255 = vmatprep.subr.mxu0 0.0
    %1256 = vmatpush2.msra.mxu0 0.0
    %1257 = vmatprep.subr.mxu0 0.0
    %1258 = vmatpush2.msra.mxu0 0.0
    %1259 = vmatprep.subr.mxu0 0.0
    %1260 = vmatpush2.msra.mxu0 0.0
    %1261 = vmatprep.subr.mxu0 0.0
    %1262 = vmatpush2.msra.mxu0 0.0
    %1263 = vmatprep.subr.mxu0 0.0
    %1264 = vmatpush2.msra.mxu0 0.0
    %1265 = vmatprep.subr.mxu0 0.0
    %1266 = vmatpush2.msra.mxu0 0.0
    %1267 = vmatprep.subr.mxu0 0.0
    %1268 = vmatpush2.msra.mxu0 0.0
    %1269 = vmatprep.subr.mxu0 0.0
    %1270 = vmatpush2.msra.mxu0 0.0
    %1271 = vmatprep.subr.mxu0 0.0
    %1272 = vmatpush2.msra.mxu0 0.0
    %1273 = vmatprep.subr.mxu0 0.0
    %1274 = vmatpush2.msra.mxu0 0.0
    %1275 = vmatprep.subr.mxu0 0.0
    %1276 = vmatpush2.msra.mxu0 0.0
    %1277 = vmatprep.subr.mxu0 0.0
    %1278 = vmatpush2.msra.mxu0 0.0
    %1279 = vmatprep.subr.mxu0 0.0
    %1280 = vmatpush2.msra.mxu0 0.0
    %1281 = vmatprep.subr.mxu0 0.0
    %1282 = vmatpush2.msra.mxu0 0.0
    %1283 = vmatprep.subr.mxu0 0.0
    %1284 = vmatpush2.msra.mxu0 0.0
    %1285 = vmatprep.mubr.f32.mxu0 0.0
    %1286 = vmatmul.mubr.f32.gmra.mxu0 %v518
    %v1287 = vpop.f32.mrf.mxu0
    %v1288 = vadd.f32 0.0, %v1287
    %v1289 = vpop.f32.mrf.mxu0
    %1290 = vmatprep.mubr.f32.mxu0 0.0
    %1291 = vmatmul.mubr.f32.gmra.mxu0 %v521
    %v1292 = vpop.f32.mrf.mxu0
    %v1293 = vadd.f32 0.0, %v1292
    %v1294 = vpop.f32.mrf.mxu0
    %1295 = vmatprep.mubr.f32.mxu0 0.0
    %1296 = vmatmul.mubr.f32.gmra.mxu0 %v524
    %v1297 = vpop.f32.mrf.mxu0
    %v1298 = vadd.f32 0.0, %v1297
    %v1299 = vpop.f32.mrf.mxu0
    %1300 = vmatprep.mubr.f32.mxu0 0.0
    %1301 = vmatmul.mubr.f32.gmra.mxu0 %v527
    %v1302 = vpop.f32.mrf.mxu0
    %v1303 = vadd.f32 0.0, %v1302
    %v1304 = vpop.f32.mrf.mxu0
    %1305 = vdwg.mxu0
    %v1306 = vadd.f32 %v1203, %v1288
    %v1307 = vadd.f32 %v1208, %v1293
    %v1308 = vadd.f32 %v1213, %v1298
    %v1309 = vadd.f32 %v1218, %v1303
    %v1310 = vadd.f32 %v1306, %v1307
    %v1311 = vadd.f32 %v1310, %v1308
    %v1312 = vadd.f32 %v1311, %v1309
    %v1313 = vrot.slane %v1312, 4
    %v1314 = vadd.f32 %v1312, %v1313
    %v1315 = vrot.slane %v1314, 2
    %v1316 = vadd.f32 %v1314, %v1315
    %v1317 = vrot.slane %v1316, 1
    %v1318 = vadd.f32 %v1316, %v1317
    %v1319 = vmul.f32 %v1306, %v1306
    %v1320 = vmul.f32 %v1307, %v1307
    %v1321 = vmul.f32 %v1308, %v1308
    %v1322 = vmul.f32 %v1309, %v1309
    %v1323 = vadd.f32 %v1319, %v1320
    %v1324 = vadd.f32 %v1323, %v1321
    %v1325 = vadd.f32 %v1324, %v1322
    %v1326 = vrot.slane %v1325, 4
    %v1327 = vadd.f32 %v1325, %v1326
    %v1328 = vrot.slane %v1327, 2
    %v1329 = vadd.f32 %v1327, %v1328
    %v1330 = vrot.slane %v1329, 1
    %v1331 = vadd.f32 %v1329, %v1330
    %1332 = vmatprep.subr.mxu0 0.0
    %1333 = vmatpush1.msra.mxu0 %v655
    %1334 = vmatprep.subr.mxu0 0.0
    %1335 = vmatpush1.msra.mxu0 %v654
    %1336 = vmatprep.subr.mxu0 0.0
    %1337 = vmatpush1.msra.mxu0 %v653
    %1338 = vmatprep.subr.mxu0 0.0
    %1339 = vmatpush1.msra.mxu0 %v652
    %1340 = vmatprep.subr.mxu0 0.0
    %1341 = vmatpush1.msra.mxu0 %v651
    %1342 = vmatprep.subr.mxu0 0.0
    %1343 = vmatpush1.msra.mxu0 %v650
    %1344 = vmatprep.subr.mxu0 0.0
    %1345 = vmatpush1.msra.mxu0 %v649
    %1346 = vmatprep.subr.mxu0 0.0
    %1347 = vmatpush1.msra.mxu0 %v648
    %1348 = vmatprep.subr.mxu0 0.0
    %1349 = vmatpush1.msra.mxu0 %v647
    %1350 = vmatprep.subr.mxu0 0.0
    %1351 = vmatpush1.msra.mxu0 %v646
    %1352 = vmatprep.subr.mxu0 0.0
    %1353 = vmatpush1.msra.mxu0 %v645
    %1354 = vmatprep.subr.mxu0 0.0
    %1355 = vmatpush1.msra.mxu0 %v644
    %1356 = vmatprep.subr.mxu0 0.0
    %1357 = vmatpush1.msra.mxu0 %v643
    %1358 = vmatprep.subr.mxu0 0.0
    %1359 = vmatpush1.msra.mxu0 %v642
    %1360 = vmatprep.subr.mxu0 0.0
    %1361 = vmatpush1.msra.mxu0 %v641
    %1362 = vmatprep.subr.mxu0 0.0
    %1363 = vmatpush1.msra.mxu0 %v640
    %1364 = vmatprep.subr.mxu0 0.0
    %1365 = vmatpush2.msra.mxu0 0.0
    %1366 = vmatprep.subr.mxu0 0.0
    %1367 = vmatpush2.msra.mxu0 0.0
    %1368 = vmatprep.subr.mxu0 0.0
    %1369 = vmatpush2.msra.mxu0 0.0
    %1370 = vmatprep.subr.mxu0 0.0
    %1371 = vmatpush2.msra.mxu0 0.0
    %1372 = vmatprep.subr.mxu0 0.0
    %1373 = vmatpush2.msra.mxu0 0.0
    %1374 = vmatprep.subr.mxu0 0.0
    %1375 = vmatpush2.msra.mxu0 0.0
    %1376 = vmatprep.subr.mxu0 0.0
    %1377 = vmatpush2.msra.mxu0 0.0
    %1378 = vmatprep.subr.mxu0 0.0
    %1379 = vmatpush2.msra.mxu0 0.0
    %1380 = vmatprep.subr.mxu0 0.0
    %1381 = vmatpush2.msra.mxu0 0.0
    %1382 = vmatprep.subr.mxu0 0.0
    %1383 = vmatpush2.msra.mxu0 0.0
    %1384 = vmatprep.subr.mxu0 0.0
    %1385 = vmatpush2.msra.mxu0 0.0
    %1386 = vmatprep.subr.mxu0 0.0
    %1387 = vmatpush2.msra.mxu0 0.0
    %1388 = vmatprep.subr.mxu0 0.0
    %1389 = vmatpush2.msra.mxu0 0.0
    %1390 = vmatprep.subr.mxu0 0.0
    %1391 = vmatpush2.msra.mxu0 0.0
    %1392 = vmatprep.subr.mxu0 0.0
    %1393 = vmatpush2.msra.mxu0 0.0
    %1394 = vmatprep.subr.mxu0 0.0
    %1395 = vmatpush2.msra.mxu0 0.0
    %1396 = vmatprep.mubr.f32.mxu0 0.0
    %1397 = vmatmul.mubr.f32.gmra.mxu0 %v1318
    %v1398 = vpop.f32.mrf.mxu0
    %v1399 = vadd.f32 0.0, %v1398
    %v1400 = vpop.f32.mrf.mxu0
    %1401 = vdwg.mxu0
    %v1402 = vmul.f32 %v1399, 0.001953125
    %1403 = vmatprep.subr.mxu0 0.0
    %1404 = vmatpush1.msra.mxu0 %v655
    %1405 = vmatprep.subr.mxu0 0.0
    %1406 = vmatpush1.msra.mxu0 %v654
    %1407 = vmatprep.subr.mxu0 0.0
    %1408 = vmatpush1.msra.mxu0 %v653
    %1409 = vmatprep.subr.mxu0 0.0
    %1410 = vmatpush1.msra.mxu0 %v652
    %1411 = vmatprep.subr.mxu0 0.0
    %1412 = vmatpush1.msra.mxu0 %v651
    %1413 = vmatprep.subr.mxu0 0.0
    %1414 = vmatpush1.msra.mxu0 %v650
    %1415 = vmatprep.subr.mxu0 0.0
    %1416 = vmatpush1.msra.mxu0 %v649
    %1417 = vmatprep.subr.mxu0 0.0
    %1418 = vmatpush1.msra.mxu0 %v648
    %1419 = vmatprep.subr.mxu0 0.0
    %1420 = vmatpush1.msra.mxu0 %v647
    %1421 = vmatprep.subr.mxu0 0.0
    %1422 = vmatpush1.msra.mxu0 %v646
    %1423 = vmatprep.subr.mxu0 0.0
    %1424 = vmatpush1.msra.mxu0 %v645
    %1425 = vmatprep.subr.mxu0 0.0
    %1426 = vmatpush1.msra.mxu0 %v644
    %1427 = vmatprep.subr.mxu0 0.0
    %1428 = vmatpush1.msra.mxu0 %v643
    %1429 = vmatprep.subr.mxu0 0.0
    %1430 = vmatpush1.msra.mxu0 %v642
    %1431 = vmatprep.subr.mxu0 0.0
    %1432 = vmatpush1.msra.mxu0 %v641
    %1433 = vmatprep.subr.mxu0 0.0
    %1434 = vmatpush1.msra.mxu0 %v640
    %1435 = vmatprep.subr.mxu0 0.0
    %1436 = vmatpush2.msra.mxu0 0.0
    %1437 = vmatprep.subr.mxu0 0.0
    %1438 = vmatpush2.msra.mxu0 0.0
    %1439 = vmatprep.subr.mxu0 0.0
    %1440 = vmatpush2.msra.mxu0 0.0
    %1441 = vmatprep.subr.mxu0 0.0
    %1442 = vmatpush2.msra.mxu0 0.0
    %1443 = vmatprep.subr.mxu0 0.0
    %1444 = vmatpush2.msra.mxu0 0.0
    %1445 = vmatprep.subr.mxu0 0.0
    %1446 = vmatpush2.msra.mxu0 0.0
    %1447 = vmatprep.subr.mxu0 0.0
    %1448 = vmatpush2.msra.mxu0 0.0
    %1449 = vmatprep.subr.mxu0 0.0
    %1450 = vmatpush2.msra.mxu0 0.0
    %1451 = vmatprep.subr.mxu0 0.0
    %1452 = vmatpush2.msra.mxu0 0.0
    %1453 = vmatprep.subr.mxu0 0.0
    %1454 = vmatpush2.msra.mxu0 0.0
    %1455 = vmatprep.subr.mxu0 0.0
    %1456 = vmatpush2.msra.mxu0 0.0
    %1457 = vmatprep.subr.mxu0 0.0
    %1458 = vmatpush2.msra.mxu0 0.0
    %1459 = vmatprep.subr.mxu0 0.0
    %1460 = vmatpush2.msra.mxu0 0.0
    %1461 = vmatprep.subr.mxu0 0.0
    %1462 = vmatpush2.msra.mxu0 0.0
    %1463 = vmatprep.subr.mxu0 0.0
    %1464 = vmatpush2.msra.mxu0 0.0
    %1465 = vmatprep.subr.mxu0 0.0
    %1466 = vmatpush2.msra.mxu0 0.0
    %1467 = vmatprep.mubr.f32.mxu0 0.0
    %1468 = vmatmul.mubr.f32.gmra.mxu0 %v1331
    %v1469 = vpop.f32.mrf.mxu0
    %v1470 = vadd.f32 0.0, %v1469
    %v1471 = vpop.f32.mrf.mxu0
    %1472 = vdwg.mxu0
    %v1473 = vmul.f32 %v1470, 0.001953125
    %v1474 = vmul.f32 %v1402, %v1402
    %v1475 = vsub.f32 %v1473, %v1474
    %v1476 = vld [vmem:[%s5] sm:$0x1]
    %v1477 = vadd.f32 %v1475, 1e-05
    %v1478 = vrsqrt.pop %v1477
    %v1479 = vmul.f32 %v1476, %v1478
    %v1480 = vld [vmem:[%s6] sm:$0x1]
    %v1481 = vmul.f32 %v1402, %v1479
    %v1482 = vsub.f32 %v1480, %v1481
    %v1484 = vlaneseq
    %v1485 = vshrl.u32 %v1484, 7
    %v1486 = vsub.s32 0, %v1485
    %v1487 = vrot.slane %v1479, %v1486
    %v1489 = vmul.f32 %v1306, %v1487
    %v1490 = vmul.f32 %v1307, %v1487
    %v1491 = vmul.f32 %v1308, %v1487
    %v1492 = vmul.f32 %v1309, %v1487
    %v1494 = vlaneseq
    %v1495 = vshrl.u32 %v1494, 7
    %v1496 = vsub.s32 0, %v1495
    %v1497 = vrot.slane %v1482, %v1496
    %v1499 = vadd.f32 %v1489, %v1497
    %v1500 = vadd.f32 %v1490, %v1497
    %v1501 = vadd.f32 %v1491, %v1497
    %v1502 = vadd.f32 %v1492, %v1497
    %v1503 = vadd.f32 %v1499, %v101
    %v1504 = vadd.f32 %v1500, %v102
    %v1505 = vadd.f32 %v1501, %v103
    %v1506 = vadd.f32 %v1502, %v104
    %v1507 = vmax.f32 %v1503, 0.0
    %v1508 = vmax.f32 %v1504, 0.0
    %v1509 = vmax.f32 %v1505, 0.0
    %v1510 = vmax.f32 %v1506, 0.0
    %1511 = vst [vmem:[#allocation11] sm:$0xff] %v1507
    %1512 = vst [vmem:[#allocation11 + $0x8] sm:$0xff] %v1508
    %1513 = vst [vmem:[#allocation11 + $0x10] sm:$0xff] %v1509
    %1514 = vst [vmem:[#allocation11 + $0x18] sm:$0xff] %v1510
    // Predicated region
    $region58: #{tpu_custom_call.1} parent=1 // pred_check
      _
    $region59: #{tpu_custom_call.1} parent=1 // pred_check_branch
      %1516 = sbr.rel (0) target = $region61
    $region60: #{tpu_custom_call.1} parent=1 // pred_region
      %s1518 = ssub.s32 512, 512
      %1519 = vsyncadd [#allocation4], %s1518
      %s1520 = sshll.u32 [#allocation11], 4
      %s1521 = int_to_ptr.vmem [resolvable:$true] %s1520
      %1526 = dma.vmem_to_hbm [thread:$0]  %s1521, 512, %s9, [#allocation4], 128, 128, 8
    $region61: #{tpu_custom_call.1} parent=1 // pred_fallthru
      _
    // Predicated region
    $region62: #{tpu_custom_call.1} parent=1 // pred_check
      _
    $region63: #{tpu_custom_call.1} parent=1 // pred_check_branch
      %1528 = sbr.rel (0) target = $region65
    $region64: #{tpu_custom_call.1} parent=1 // pred_region
      %1529 = dma.done [#allocation4], 512
    $region65: #{tpu_custom_call.1} parent=1 // pred_fallthru
      _
    %1530 = vsyncpa [#allocation3], 1
    %1531 = vsyncpa [#allocation6], 1
    %1532 = vsyncpa [#allocation9], 1
    %1533 = vsyncpa [#allocation4], 1

</llo_original>
